<compile_context>
chip_gen: v7x
topology: tpu7x:2x2x1
jax: 0.10.0
libtpu: 0.0.40
codegen_flags: <defaults>
</compile_context>

<pallas_src>
from functools import partial

import jax
import jax.numpy as jnp
from jax.experimental import pallas as pl
from jax.experimental.pallas import tpu as pltpu

EPS = 1e-5
VMEM_LIMIT = 32 * 1024 * 1024      # safe scoped-VMEM on v5e/v6e/v7x
_TILE_BUDGET_BYTES = 2 << 20       # per-block activation budget (f32)


# --------------------------------------------------------------------------- #
# Kernels
# --------------------------------------------------------------------------- #
def _dw_stats_kernel(stride, xp_ref, wdw_ref, dw_ref, st_ref):
    """Sweep 1: depthwise 3x3 conv (stride folded in) + BN1 partial stats."""
    C = xp_ref.shape[3]
    Ho, Wo = dw_ref.shape[1], dw_ref.shape[2]

    acc = jnp.zeros((Ho, Wo, C), jnp.float32)
    xw = xp_ref[0] if stride > 1 else None          # single load for strided path
    for di in range(3):
        for dj in range(3):
            k = di * 3 + dj
            w = wdw_ref[k:k + 1, :].reshape(1, 1, C)
            if stride == 1:
                win = xp_ref[0, di:di + Ho, dj:dj + Wo, :]
            else:
                # stride folded into the tap read -> no full-res acc, no ::stride slice
                win = jax.lax.slice(
                    xw, (di, dj, 0),
                    (di + (Ho - 1) * stride + 1, dj + (Wo - 1) * stride + 1, C),
                    (stride, stride, 1))
            acc = acc + win * w

    dw_ref[0] = acc
    # Single fused pass over acc: sum and sum-of-squares (var derived in wrapper).
    st_ref[0, 0:1, :] = jnp.sum(acc, axis=(0, 1), keepdims=True)[0]
    st_ref[0, 1:2, :] = jnp.sum(acc * acc, axis=(0, 1), keepdims=True)[0]


def _pw_stats_kernel(use_bf16, dw_ref, s1_ref, wpw_ref, z_ref, st_ref):
    """Sweep 2: fused BN1(scale/shift)+ReLU, 1x1 matmul (MXU), BN2 partial stats."""
    TH, Wo, C = dw_ref.shape[1], dw_ref.shape[2], dw_ref.shape[3]
    Cout = z_ref.shape[3]

    scale1 = s1_ref[0:1, :].reshape(1, 1, C)
    shift1 = s1_ref[1:2, :].reshape(1, 1, C)
    y = jnp.maximum(dw_ref[0] * scale1 + shift1, 0.0)       # (TH, Wo, C)
    y2 = y.reshape(TH * Wo, C)                               # M x C for the MXU

    w = wpw_ref[...]
    if use_bf16:   # v6e/v7x: bf16 MXU inputs, f32 accumulation
        z = jnp.dot(y2.astype(jnp.bfloat16), w.astype(jnp.bfloat16),
                    preferred_element_type=jnp.float32)
    else:          # v5e / strict-accuracy path
        z = jnp.dot(y2, w, preferred_element_type=jnp.float32)

    z_ref[0] = z.reshape(TH, Wo, Cout)
    st_ref[0, 0, 0:1, :] = jnp.sum(z, axis=0, keepdims=True)
    st_ref[0, 0, 1:2, :] = jnp.sum(z * z, axis=0, keepdims=True)


def _bn2_relu_kernel(z_ref, s2_ref, out_ref):
    """Sweep 3: fused BN2(scale/shift)+ReLU, in place over z."""
    Cout = out_ref.shape[3]
    scale2 = s2_ref[0:1, :].reshape(1, 1, Cout)
    shift2 = s2_ref[1:2, :].reshape(1, 1, Cout)
    out_ref[0] = jnp.maximum(z_ref[0] * scale2 + shift2, 0.0)


# --------------------------------------------------------------------------- #
# Wrapper
# --------------------------------------------------------------------------- #
def _pick_row_tile(ho, wo, cmax, budget_bytes=_TILE_BUDGET_BYTES):
    """Largest divisor of `ho` (<= ho//2 when possible) whose f32 tile fits budget."""
    limit = ho // 2 if ho > 1 else 1
    best = 1
    for th in range(1, limit + 1):
        if ho % th == 0 and th * wo * cmax * 4 <= budget_bytes:
            best = th
    return best


@partial(jax.jit, static_argnames=("stride", "use_bf16_matmul"))
def mobilenet_block(x_nchw, params, stride=1, use_bf16_matmul=False):
    """Forward pass matching the PyTorch mobilenet_block. Input/output NCHW."""
    w_dw = params["conv1_w"]   # (Cin, 1, 3, 3)
    w_pw = params["conv2_w"]   # (Cout, Cin, 1, 1)
    g1, b1 = params["bn1_gamma"], params["bn1_beta"]
    g2, b2 = params["bn2_gamma"], params["bn2_beta"]

    N, C, H, W = x_nchw.shape
    Cout = w_pw.shape[0]
    Ho = (H + 2 - 3) // stride + 1
    Wo = (W + 2 - 3) // stride + 1
    Hp, Wp = H + 2, W + 2
    Mrows = N * Ho * Wo

    # Layout conversion + halo padding: fused into one XLA pass under jit.
    x_nhwc = jnp.transpose(x_nchw, (0, 2, 3, 1)).astype(jnp.float32)
    xp = jnp.pad(x_nhwc, ((0, 0), (1, 1), (1, 1), (0, 0)))
    wdw9 = jnp.transpose(w_dw[:, 0].reshape(C, 9), (1, 0)).astype(jnp.float32)   # (9, C)
    wpw = jnp.transpose(w_pw[:, :, 0, 0], (1, 0)).astype(jnp.float32)            # (C, Cout)

    # ---- sweep 1: depthwise conv + BN1 partial stats (grid over N) ----------
    dw, st1 = pl.pallas_call(
        partial(_dw_stats_kernel, stride),
        out_shape=(jax.ShapeDtypeStruct((N, Ho, Wo, C), jnp.float32),
                   jax.ShapeDtypeStruct((N, 2, C), jnp.float32)),
        grid=(N,),
        in_specs=[pl.BlockSpec((1, Hp, Wp, C), lambda n: (n, 0, 0, 0)),
                  pl.BlockSpec((9, C), lambda n: (0, 0))],
        out_specs=(pl.BlockSpec((1, Ho, Wo, C), lambda n: (n, 0, 0, 0)),
                   pl.BlockSpec((1, 2, C), lambda n: (n, 0, 0))),
        compiler_params=pltpu.CompilerParams(
            dimension_semantics=("parallel",), vmem_limit_bytes=VMEM_LIMIT),
        cost_estimate=pl.CostEstimate(
            flops=21 * N * Ho * Wo * C, transcendentals=0,
            bytes_accessed=4 * (N * Hp * Wp * C + N * Ho * Wo * C + 9 * C + 2 * N * C)),
    )(xp, wdw9)

    # BN1 finalize (tiny (2,C) reduction): one-pass variance + fused scale/shift.
    cnt = float(Mrows)
    sums1 = jnp.sum(st1, axis=0)                               # (2, C)
    mean1 = sums1[0] / cnt
    var1 = jnp.maximum(sums1[1] / cnt - mean1 * mean1, 0.0)
    scale1 = g1.astype(jnp.float32) * jax.lax.rsqrt(var1 + EPS)
    shift1 = b1.astype(jnp.float32) - mean1 * scale1
    s1 = jnp.stack([scale1, shift1])                           # (2, C)

    # ---- sweep 2: BN1+ReLU + pointwise matmul + BN2 partial stats -----------
    TH = _pick_row_tile(Ho, Wo, max(C, Cout))
    nH = Ho // TH
    z, st2 = pl.pallas_call(
        partial(_pw_stats_kernel, use_bf16_matmul),
        out_shape=(jax.ShapeDtypeStruct((N, Ho, Wo, Cout), jnp.float32),
                   jax.ShapeDtypeStruct((N, nH, 2, Cout), jnp.float32)),
        grid=(N, nH),
        in_specs=[pl.BlockSpec((1, TH, Wo, C), lambda n, h: (n, h, 0, 0)),
                  pl.BlockSpec((2, C), lambda n, h: (0, 0)),
                  pl.BlockSpec((C, Cout), lambda n, h: (0, 0))],
        out_specs=(pl.BlockSpec((1, TH, Wo, Cout), lambda n, h: (n, h, 0, 0)),
                   pl.BlockSpec((1, 1, 2, Cout), lambda n, h: (n, h, 0, 0))),
        compiler_params=pltpu.CompilerParams(
            dimension_semantics=("parallel", "parallel"), vmem_limit_bytes=VMEM_LIMIT),
        cost_estimate=pl.CostEstimate(
            flops=2 * Mrows * C * Cout + Mrows * (3 * C + 4 * Cout), transcendentals=0,
            bytes_accessed=4 * (Mrows * C + Mrows * Cout + C * Cout
                                + 2 * C + 2 * N * nH * Cout)),
    )(dw, s1, wpw)

    # BN2 finalize.
    sums2 = jnp.sum(st2, axis=(0, 1))                          # (2, Cout)
    mean2 = sums2[0] / cnt
    var2 = jnp.maximum(sums2[1] / cnt - mean2 * mean2, 0.0)
    scale2 = g2.astype(jnp.float32) * jax.lax.rsqrt(var2 + EPS)
    shift2 = b2.astype(jnp.float32) - mean2 * scale2
    s2 = jnp.stack([scale2, shift2])                           # (2, Cout)

    # ---- sweep 3: BN2+ReLU, in place over z ----------------------------------
    out_nhwc = pl.pallas_call(
        _bn2_relu_kernel,
        out_shape=jax.ShapeDtypeStruct((N, Ho, Wo, Cout), jnp.float32),
        grid=(N, nH),
        in_specs=[pl.BlockSpec((1, TH, Wo, Cout), lambda n, h: (n, h, 0, 0)),
                  pl.BlockSpec((2, Cout), lambda n, h: (0, 0))],
        out_specs=pl.BlockSpec((1, TH, Wo, Cout), lambda n, h: (n, h, 0, 0)),
        input_output_aliases={0: 0},
        compiler_params=pltpu.CompilerParams(
            dimension_semantics=("parallel", "parallel"), vmem_limit_bytes=VMEM_LIMIT),
        cost_estimate=pl.CostEstimate(
            flops=3 * Mrows * Cout, transcendentals=0,
            bytes_accessed=4 * (2 * Mrows * Cout + 2 * Cout)),
    )(z, s2)

    return jnp.transpose(out_nhwc, (0, 3, 1, 2))   # back to NCHW (PyTorch layout)


# --------------------------------------------------------------------------- #
# Pure-JAX reference (lax convs) for correctness check
# --------------------------------------------------------------------------- #
def _reference(x, params, stride=1):
    def bn_relu(t, g, b):
        m = jnp.mean(t, axis=(0, 2, 3), keepdims=True)
        v = jnp.mean((t - m) ** 2, axis=(0, 2, 3), keepdims=True)
        t = (t - m) * jax.lax.rsqrt(v + EPS) * g.reshape(1, -1, 1, 1) + b.reshape(1, -1, 1, 1)
        return jnp.maximum(t, 0.0)

    y = jax.lax.conv_general_dilated(
        x, params["conv1_w"], window_strides=(stride, stride),
        padding=((1, 1), (1, 1)),
        dimension_numbers=("NCHW", "OIHW", "NCHW"),
        feature_group_count=x.shape[1])
    y = bn_relu(y, params["bn1_gamma"], params["bn1_beta"])
    z = jax.lax.conv_general_dilated(
        y, params["conv2_w"], window_strides=(1, 1), padding="VALID",
        dimension_numbers=("NCHW", "OIHW", "NCHW"))
    return bn_relu(z, params["bn2_gamma"], params["bn2_beta"])


if __name__ == "__main__":
    in_planes, out_planes, stride = 4, 8, 1
    N, H, W = 2, 16, 16

    key = jax.random.PRNGKey(0)
    k = jax.random.split(key, 7)
    params = {
        "conv1_w": 0.2 * jax.random.normal(k[0], (in_planes, 1, 3, 3), jnp.float32),
        "bn1_gamma": 1.0 + 0.1 * jax.random.normal(k[1], (in_planes,), jnp.float32),
        "bn1_beta": 0.1 * jax.random.normal(k[2], (in_planes,), jnp.float32),
        "conv2_w": 0.2 * jax.random.normal(k[3], (out_planes, in_planes, 1, 1), jnp.float32),
        "bn2_gamma": 1.0 + 0.1 * jax.random.normal(k[4], (out_planes,), jnp.float32),
        "bn2_beta": 0.1 * jax.random.normal(k[5], (out_planes,), jnp.float32),
    }
    x = jax.random.normal(k[6], (N, in_planes, H, W), jnp.float32)

    out = jax.block_until_ready(mobilenet_block(x, params, stride=stride))
    ref = jax.block_until_ready(_reference(x, params, stride=stride))

    assert out.shape == ref.shape, (out.shape, ref.shape)
    assert jnp.allclose(out, ref, rtol=1e-4, atol=1e-4), float(jnp.max(jnp.abs(out - ref)))
    print("KERNEL_OK")
</pallas_src>

<mosaic_0001>
module attributes {stable_mosaic.version = 11 : i64} {
  func.func @_dw_stats_kernel(%arg0: i32, %arg1: memref<1x18x18x4xf32, #tpu.memory_space<vmem>>, %arg2: memref<9x4xf32, #tpu.memory_space<vmem>>, %arg3: memref<1x16x16x4xf32, #tpu.memory_space<vmem>>, %arg4: memref<1x2x4xf32, #tpu.memory_space<vmem>>) attributes {dimension_semantics = [#tpu.dimension_semantics<parallel>], iteration_bounds = array<i64: 2>, scalar_prefetch = 0 : i64, scratch_operands = 0 : i64, tpu.core_type = #tpu.core_type<tc>, window_params = [{transform_indices = @transform_0, window_bounds = array<i64: 1, 18, 18, 4>}, {pipeline_mode = #tpu.pipeline_mode<synchronous>, transform_indices = @transform_1, window_bounds = array<i64: 9, 4>}, {transform_indices = @transform_2, window_bounds = array<i64: 1, 16, 16, 4>}, {transform_indices = @transform_3, window_bounds = array<i64: 1, 2, 4>}]} {
    %cst = arith.constant 0.000000e+00 : f32
    %0 = vector.broadcast %cst : f32 to vector<16x16x4xf32>
    %c0 = arith.constant 0 : index
    %c0_0 = arith.constant 0 : index
    %1 = vector.load %arg2[%c0, %c0_0] : memref<9x4xf32, #tpu.memory_space<vmem>>, vector<1x4xf32>
    %2 = vector.shape_cast %1 : vector<1x4xf32> to vector<1x1x4xf32>
    %c0_1 = arith.constant 0 : index
    %c0_2 = arith.constant 0 : index
    %c0_3 = arith.constant 0 : index
    %c0_4 = arith.constant 0 : index
    %3 = vector.load %arg1[%c0_1, %c0_2, %c0_3, %c0_4] : memref<1x18x18x4xf32, #tpu.memory_space<vmem>>, vector<1x16x16x4xf32>
    %4 = vector.shape_cast %3 : vector<1x16x16x4xf32> to vector<16x16x4xf32>
    %5 = vector.broadcast %2 : vector<1x1x4xf32> to vector<16x16x4xf32>
    %6 = arith.mulf %4, %5 : vector<16x16x4xf32>
    %7 = arith.addf %0, %6 : vector<16x16x4xf32>
    %c1 = arith.constant 1 : index
    %c0_5 = arith.constant 0 : index
    %8 = vector.load %arg2[%c1, %c0_5] : memref<9x4xf32, #tpu.memory_space<vmem>>, vector<1x4xf32>
    %9 = vector.shape_cast %8 : vector<1x4xf32> to vector<1x1x4xf32>
    %c0_6 = arith.constant 0 : index
    %c0_7 = arith.constant 0 : index
    %c1_8 = arith.constant 1 : index
    %c0_9 = arith.constant 0 : index
    %10 = vector.load %arg1[%c0_6, %c0_7, %c1_8, %c0_9] : memref<1x18x18x4xf32, #tpu.memory_space<vmem>>, vector<1x16x16x4xf32>
    %11 = vector.shape_cast %10 : vector<1x16x16x4xf32> to vector<16x16x4xf32>
    %12 = vector.broadcast %9 : vector<1x1x4xf32> to vector<16x16x4xf32>
    %13 = arith.mulf %11, %12 : vector<16x16x4xf32>
    %14 = arith.addf %7, %13 : vector<16x16x4xf32>
    %c2 = arith.constant 2 : index
    %c0_10 = arith.constant 0 : index
    %15 = vector.load %arg2[%c2, %c0_10] : memref<9x4xf32, #tpu.memory_space<vmem>>, vector<1x4xf32>
    %16 = vector.shape_cast %15 : vector<1x4xf32> to vector<1x1x4xf32>
    %c0_11 = arith.constant 0 : index
    %c0_12 = arith.constant 0 : index
    %c2_13 = arith.constant 2 : index
    %c0_14 = arith.constant 0 : index
    %17 = vector.load %arg1[%c0_11, %c0_12, %c2_13, %c0_14] : memref<1x18x18x4xf32, #tpu.memory_space<vmem>>, vector<1x16x16x4xf32>
    %18 = vector.shape_cast %17 : vector<1x16x16x4xf32> to vector<16x16x4xf32>
    %19 = vector.broadcast %16 : vector<1x1x4xf32> to vector<16x16x4xf32>
    %20 = arith.mulf %18, %19 : vector<16x16x4xf32>
    %21 = arith.addf %14, %20 : vector<16x16x4xf32>
    %c3 = arith.constant 3 : index
    %c0_15 = arith.constant 0 : index
    %22 = vector.load %arg2[%c3, %c0_15] : memref<9x4xf32, #tpu.memory_space<vmem>>, vector<1x4xf32>
    %23 = vector.shape_cast %22 : vector<1x4xf32> to vector<1x1x4xf32>
    %c0_16 = arith.constant 0 : index
    %c1_17 = arith.constant 1 : index
    %c0_18 = arith.constant 0 : index
    %c0_19 = arith.constant 0 : index
    %24 = vector.load %arg1[%c0_16, %c1_17, %c0_18, %c0_19] : memref<1x18x18x4xf32, #tpu.memory_space<vmem>>, vector<1x16x16x4xf32>
    %25 = vector.shape_cast %24 : vector<1x16x16x4xf32> to vector<16x16x4xf32>
    %26 = vector.broadcast %23 : vector<1x1x4xf32> to vector<16x16x4xf32>
    %27 = arith.mulf %25, %26 : vector<16x16x4xf32>
    %28 = arith.addf %21, %27 : vector<16x16x4xf32>
    %c4 = arith.constant 4 : index
    %c0_20 = arith.constant 0 : index
    %29 = vector.load %arg2[%c4, %c0_20] : memref<9x4xf32, #tpu.memory_space<vmem>>, vector<1x4xf32>
    %30 = vector.shape_cast %29 : vector<1x4xf32> to vector<1x1x4xf32>
    %c0_21 = arith.constant 0 : index
    %c1_22 = arith.constant 1 : index
    %c1_23 = arith.constant 1 : index
    %c0_24 = arith.constant 0 : index
    %31 = vector.load %arg1[%c0_21, %c1_22, %c1_23, %c0_24] : memref<1x18x18x4xf32, #tpu.memory_space<vmem>>, vector<1x16x16x4xf32>
    %32 = vector.shape_cast %31 : vector<1x16x16x4xf32> to vector<16x16x4xf32>
    %33 = vector.broadcast %30 : vector<1x1x4xf32> to vector<16x16x4xf32>
    %34 = arith.mulf %32, %33 : vector<16x16x4xf32>
    %35 = arith.addf %28, %34 : vector<16x16x4xf32>
    %c5 = arith.constant 5 : index
    %c0_25 = arith.constant 0 : index
    %36 = vector.load %arg2[%c5, %c0_25] : memref<9x4xf32, #tpu.memory_space<vmem>>, vector<1x4xf32>
    %37 = vector.shape_cast %36 : vector<1x4xf32> to vector<1x1x4xf32>
    %c0_26 = arith.constant 0 : index
    %c1_27 = arith.constant 1 : index
    %c2_28 = arith.constant 2 : index
    %c0_29 = arith.constant 0 : index
    %38 = vector.load %arg1[%c0_26, %c1_27, %c2_28, %c0_29] : memref<1x18x18x4xf32, #tpu.memory_space<vmem>>, vector<1x16x16x4xf32>
    %39 = vector.shape_cast %38 : vector<1x16x16x4xf32> to vector<16x16x4xf32>
    %40 = vector.broadcast %37 : vector<1x1x4xf32> to vector<16x16x4xf32>
    %41 = arith.mulf %39, %40 : vector<16x16x4xf32>
    %42 = arith.addf %35, %41 : vector<16x16x4xf32>
    %c6 = arith.constant 6 : index
    %c0_30 = arith.constant 0 : index
    %43 = vector.load %arg2[%c6, %c0_30] : memref<9x4xf32, #tpu.memory_space<vmem>>, vector<1x4xf32>
    %44 = vector.shape_cast %43 : vector<1x4xf32> to vector<1x1x4xf32>
    %c0_31 = arith.constant 0 : index
    %c2_32 = arith.constant 2 : index
    %c0_33 = arith.constant 0 : index
    %c0_34 = arith.constant 0 : index
    %45 = vector.load %arg1[%c0_31, %c2_32, %c0_33, %c0_34] : memref<1x18x18x4xf32, #tpu.memory_space<vmem>>, vector<1x16x16x4xf32>
    %46 = vector.shape_cast %45 : vector<1x16x16x4xf32> to vector<16x16x4xf32>
    %47 = vector.broadcast %44 : vector<1x1x4xf32> to vector<16x16x4xf32>
    %48 = arith.mulf %46, %47 : vector<16x16x4xf32>
    %49 = arith.addf %42, %48 : vector<16x16x4xf32>
    %c7 = arith.constant 7 : index
    %c0_35 = arith.constant 0 : index
    %50 = vector.load %arg2[%c7, %c0_35] : memref<9x4xf32, #tpu.memory_space<vmem>>, vector<1x4xf32>
    %51 = vector.shape_cast %50 : vector<1x4xf32> to vector<1x1x4xf32>
    %c0_36 = arith.constant 0 : index
    %c2_37 = arith.constant 2 : index
    %c1_38 = arith.constant 1 : index
    %c0_39 = arith.constant 0 : index
    %52 = vector.load %arg1[%c0_36, %c2_37, %c1_38, %c0_39] : memref<1x18x18x4xf32, #tpu.memory_space<vmem>>, vector<1x16x16x4xf32>
    %53 = vector.shape_cast %52 : vector<1x16x16x4xf32> to vector<16x16x4xf32>
    %54 = vector.broadcast %51 : vector<1x1x4xf32> to vector<16x16x4xf32>
    %55 = arith.mulf %53, %54 : vector<16x16x4xf32>
    %56 = arith.addf %49, %55 : vector<16x16x4xf32>
    %c8 = arith.constant 8 : index
    %c0_40 = arith.constant 0 : index
    %57 = vector.load %arg2[%c8, %c0_40] : memref<9x4xf32, #tpu.memory_space<vmem>>, vector<1x4xf32>
    %58 = vector.shape_cast %57 : vector<1x4xf32> to vector<1x1x4xf32>
    %c0_41 = arith.constant 0 : index
    %c2_42 = arith.constant 2 : index
    %c2_43 = arith.constant 2 : index
    %c0_44 = arith.constant 0 : index
    %59 = vector.load %arg1[%c0_41, %c2_42, %c2_43, %c0_44] : memref<1x18x18x4xf32, #tpu.memory_space<vmem>>, vector<1x16x16x4xf32>
    %60 = vector.shape_cast %59 : vector<1x16x16x4xf32> to vector<16x16x4xf32>
    %61 = vector.broadcast %58 : vector<1x1x4xf32> to vector<16x16x4xf32>
    %62 = arith.mulf %60, %61 : vector<16x16x4xf32>
    %63 = arith.addf %56, %62 : vector<16x16x4xf32>
    %c0_45 = arith.constant 0 : index
    %c0_46 = arith.constant 0 : index
    %c0_47 = arith.constant 0 : index
    %c0_48 = arith.constant 0 : index
    %64 = vector.load %arg3[%c0_45, %c0_46, %c0_47, %c0_48] : memref<1x16x16x4xf32, #tpu.memory_space<vmem>>, vector<1x16x16x4xf32>
    %65 = vector.shape_cast %64 : vector<1x16x16x4xf32> to vector<16x16x4xf32>
    %66 = vector.shape_cast %63 : vector<16x16x4xf32> to vector<1x16x16x4xf32>
    tpu.vector_store %arg3[%c0_45, %c0_46, %c0_47, %c0_48], %66 {strides = array<i32>} : memref<1x16x16x4xf32, #tpu.memory_space<vmem>>, vector<1x16x16x4xf32>,
    %cst_49 = arith.constant dense<0.000000e+00> : vector<4xf32>
    %67 = vector.multi_reduction <add>, %63, %cst_49 [0, 1] : vector<16x16x4xf32> to vector<4xf32>
    %68 = vector.shape_cast %67 : vector<4xf32> to vector<1x1x4xf32>
    %69 = vector.shape_cast %68 : vector<1x1x4xf32> to vector<1x4xf32>
    %c0_50 = arith.constant 0 : index
    %c0_51 = arith.constant 0 : index
    %c0_52 = arith.constant 0 : index
    %70 = vector.load %arg4[%c0_50, %c0_51, %c0_52] : memref<1x2x4xf32, #tpu.memory_space<vmem>>, vector<1x1x4xf32>
    %71 = vector.shape_cast %70 : vector<1x1x4xf32> to vector<1x4xf32>
    %72 = vector.shape_cast %69 : vector<1x4xf32> to vector<1x1x4xf32>
    tpu.vector_store %arg4[%c0_50, %c0_51, %c0_52], %72 {strides = array<i32>} : memref<1x2x4xf32, #tpu.memory_space<vmem>>, vector<1x1x4xf32>,
    %73 = arith.mulf %63, %63 : vector<16x16x4xf32>
    %cst_53 = arith.constant dense<0.000000e+00> : vector<4xf32>
    %74 = vector.multi_reduction <add>, %73, %cst_53 [0, 1] : vector<16x16x4xf32> to vector<4xf32>
    %75 = vector.shape_cast %74 : vector<4xf32> to vector<1x1x4xf32>
    %76 = vector.shape_cast %75 : vector<1x1x4xf32> to vector<1x4xf32>
    %c0_54 = arith.constant 0 : index
    %c1_55 = arith.constant 1 : index
    %c0_56 = arith.constant 0 : index
    %77 = vector.load %arg4[%c0_54, %c1_55, %c0_56] : memref<1x2x4xf32, #tpu.memory_space<vmem>>, vector<1x1x4xf32>
    %78 = vector.shape_cast %77 : vector<1x1x4xf32> to vector<1x4xf32>
    %79 = vector.shape_cast %76 : vector<1x4xf32> to vector<1x1x4xf32>
    tpu.vector_store %arg4[%c0_54, %c1_55, %c0_56], %79 {strides = array<i32>} : memref<1x2x4xf32, #tpu.memory_space<vmem>>, vector<1x1x4xf32>,
    return
  }
  func.func @transform_0(%arg0: i32) -> (i32, i32, i32, i32) {
    %c0_i32 = arith.constant 0 : i32
    %c0_i32_0 = arith.constant 0 : i32
    %c0_i32_1 = arith.constant 0 : i32
    %c0_i32_2 = arith.constant 0 : i32
    return %arg0, %c0_i32, %c0_i32_0, %c0_i32_1 : i32, i32, i32, i32
  }
  func.func @transform_1(%arg0: i32) -> (i32, i32) {
    %c0_i32 = arith.constant 0 : i32
    %c0_i32_0 = arith.constant 0 : i32
    %c0_i32_1 = arith.constant 0 : i32
    return %c0_i32, %c0_i32_0 : i32, i32
  }
  func.func @transform_2(%arg0: i32) -> (i32, i32, i32, i32) {
    %c0_i32 = arith.constant 0 : i32
    %c0_i32_0 = arith.constant 0 : i32
    %c0_i32_1 = arith.constant 0 : i32
    %c0_i32_2 = arith.constant 0 : i32
    return %arg0, %c0_i32, %c0_i32_0, %c0_i32_1 : i32, i32, i32, i32
  }
  func.func @transform_3(%arg0: i32) -> (i32, i32, i32) {
    %c0_i32 = arith.constant 0 : i32
    %c0_i32_0 = arith.constant 0 : i32
    %c0_i32_1 = arith.constant 0 : i32
    return %arg0, %c0_i32, %c0_i32_0 : i32, i32, i32
  }
}

module attributes {stable_mosaic.version = 11 : i64} {
  func.func @_pw_stats_kernel(%arg0: i32, %arg1: i32, %arg2: memref<1x8x16x4xf32, #tpu.memory_space<vmem>>, %arg3: memref<2x4xf32, #tpu.memory_space<vmem>>, %arg4: memref<4x8xf32, #tpu.memory_space<vmem>>, %arg5: memref<1x8x16x8xf32, #tpu.memory_space<vmem>>, %arg6: memref<1x1x2x8xf32, #tpu.memory_space<vmem>>) attributes {dimension_semantics = [#tpu.dimension_semantics<parallel>, #tpu.dimension_semantics<parallel>], iteration_bounds = array<i64: 2, 2>, scalar_prefetch = 0 : i64, scratch_operands = 0 : i64, tpu.core_type = #tpu.core_type<tc>, window_params = [{transform_indices = @transform_0, window_bounds = array<i64: 1, 8, 16, 4>}, {pipeline_mode = #tpu.pipeline_mode<synchronous>, transform_indices = @transform_1, window_bounds = array<i64: 2, 4>}, {pipeline_mode = #tpu.pipeline_mode<synchronous>, transform_indices = @transform_2, window_bounds = array<i64: 4, 8>}, {transform_indices = @transform_3, window_bounds = array<i64: 1, 8, 16, 8>}, {transform_indices = @transform_4, window_bounds = array<i64: 1, 1, 2, 8>}]} {
    %c0 = arith.constant 0 : index
    %c0_0 = arith.constant 0 : index
    %0 = vector.load %arg3[%c0, %c0_0] : memref<2x4xf32, #tpu.memory_space<vmem>>, vector<1x4xf32>
    %1 = vector.shape_cast %0 : vector<1x4xf32> to vector<1x1x4xf32>
    %c1 = arith.constant 1 : index
    %c0_1 = arith.constant 0 : index
    %2 = vector.load %arg3[%c1, %c0_1] : memref<2x4xf32, #tpu.memory_space<vmem>>, vector<1x4xf32>
    %3 = vector.shape_cast %2 : vector<1x4xf32> to vector<1x1x4xf32>
    %c0_2 = arith.constant 0 : index
    %c0_3 = arith.constant 0 : index
    %c0_4 = arith.constant 0 : index
    %c0_5 = arith.constant 0 : index
    %4 = vector.load %arg2[%c0_2, %c0_3, %c0_4, %c0_5] : memref<1x8x16x4xf32, #tpu.memory_space<vmem>>, vector<1x8x16x4xf32>
    %5 = vector.shape_cast %4 : vector<1x8x16x4xf32> to vector<8x16x4xf32>
    %6 = vector.broadcast %1 : vector<1x1x4xf32> to vector<8x16x4xf32>
    %7 = arith.mulf %5, %6 : vector<8x16x4xf32>
    %8 = vector.broadcast %3 : vector<1x1x4xf32> to vector<8x16x4xf32>
    %9 = arith.addf %7, %8 : vector<8x16x4xf32>
    %cst = arith.constant 0.000000e+00 : f32
    %10 = vector.broadcast %cst : f32 to vector<8x16x4xf32>
    %11 = arith.maximumf %9, %10 : vector<8x16x4xf32>
    %12 = vector.shape_cast %11 : vector<8x16x4xf32> to vector<128x4xf32>
    %c0_6 = arith.constant 0 : index
    %c0_7 = arith.constant 0 : index
    %13 = vector.load %arg4[%c0_6, %c0_7] : memref<4x8xf32, #tpu.memory_space<vmem>>, vector<4x8xf32>
    %cst_8 = arith.constant dense<0.000000e+00> : vector<128x8xf32>
    %14 = tpu.matmul %12, %13, %cst_8 {dimension_numbers = #tpu.dot_dimension_numbers<[1], [0], [0], [1], [0, 0, 1, 1], [], []>} : vector<128x4xf32>, vector<4x8xf32>, vector<128x8xf32> -> vector<128x8xf32>
    %15 = vector.shape_cast %14 : vector<128x8xf32> to vector<8x16x8xf32>
    %c0_9 = arith.constant 0 : index
    %c0_10 = arith.constant 0 : index
    %c0_11 = arith.constant 0 : index
    %c0_12 = arith.constant 0 : index
    %16 = vector.load %arg5[%c0_9, %c0_10, %c0_11, %c0_12] : memref<1x8x16x8xf32, #tpu.memory_space<vmem>>, vector<1x8x16x8xf32>
    %17 = vector.shape_cast %16 : vector<1x8x16x8xf32> to vector<8x16x8xf32>
    %18 = vector.shape_cast %15 : vector<8x16x8xf32> to vector<1x8x16x8xf32>
    tpu.vector_store %arg5[%c0_9, %c0_10, %c0_11, %c0_12], %18 {strides = array<i32>} : memref<1x8x16x8xf32, #tpu.memory_space<vmem>>, vector<1x8x16x8xf32>,
    %cst_13 = arith.constant dense<0.000000e+00> : vector<8xf32>
    %19 = vector.multi_reduction <add>, %14, %cst_13 [0] : vector<128x8xf32> to vector<8xf32>
    %20 = vector.shape_cast %19 : vector<8xf32> to vector<1x8xf32>
    %c0_14 = arith.constant 0 : index
    %c0_15 = arith.constant 0 : index
    %c0_16 = arith.constant 0 : index
    %c0_17 = arith.constant 0 : index
    %21 = vector.load %arg6[%c0_14, %c0_15, %c0_16, %c0_17] : memref<1x1x2x8xf32, #tpu.memory_space<vmem>>, vector<1x1x1x8xf32>
    %22 = vector.shape_cast %21 : vector<1x1x1x8xf32> to vector<1x8xf32>
    %23 = vector.shape_cast %20 : vector<1x8xf32> to vector<1x1x1x8xf32>
    tpu.vector_store %arg6[%c0_14, %c0_15, %c0_16, %c0_17], %23 {strides = array<i32>} : memref<1x1x2x8xf32, #tpu.memory_space<vmem>>, vector<1x1x1x8xf32>,
    %24 = arith.mulf %14, %14 : vector<128x8xf32>
    %cst_18 = arith.constant dense<0.000000e+00> : vector<8xf32>
    %25 = vector.multi_reduction <add>, %24, %cst_18 [0] : vector<128x8xf32> to vector<8xf32>
    %26 = vector.shape_cast %25 : vector<8xf32> to vector<1x8xf32>
    %c0_19 = arith.constant 0 : index
    %c0_20 = arith.constant 0 : index
    %c1_21 = arith.constant 1 : index
    %c0_22 = arith.constant 0 : index
    %27 = vector.load %arg6[%c0_19, %c0_20, %c1_21, %c0_22] : memref<1x1x2x8xf32, #tpu.memory_space<vmem>>, vector<1x1x1x8xf32>
    %28 = vector.shape_cast %27 : vector<1x1x1x8xf32> to vector<1x8xf32>
    %29 = vector.shape_cast %26 : vector<1x8xf32> to vector<1x1x1x8xf32>
    tpu.vector_store %arg6[%c0_19, %c0_20, %c1_21, %c0_22], %29 {strides = array<i32>} : memref<1x1x2x8xf32, #tpu.memory_space<vmem>>, vector<1x1x1x8xf32>,
    return
  }
  func.func @transform_0(%arg0: i32, %arg1: i32) -> (i32, i32, i32, i32) {
    %c0_i32 = arith.constant 0 : i32
    %c0_i32_0 = arith.constant 0 : i32
    %c0_i32_1 = arith.constant 0 : i32
    return %arg0, %arg1, %c0_i32, %c0_i32_0 : i32, i32, i32, i32
  }
  func.func @transform_1(%arg0: i32, %arg1: i32) -> (i32, i32) {
    %c0_i32 = arith.constant 0 : i32
    %c0_i32_0 = arith.constant 0 : i32
    %c0_i32_1 = arith.constant 0 : i32
    return %c0_i32, %c0_i32_0 : i32, i32
  }
  func.func @transform_2(%arg0: i32, %arg1: i32) -> (i32, i32) {
    %c0_i32 = arith.constant 0 : i32
    %c0_i32_0 = arith.constant 0 : i32
    %c0_i32_1 = arith.constant 0 : i32
    return %c0_i32, %c0_i32_0 : i32, i32
  }
  func.func @transform_3(%arg0: i32, %arg1: i32) -> (i32, i32, i32, i32) {
    %c0_i32 = arith.constant 0 : i32
    %c0_i32_0 = arith.constant 0 : i32
    %c0_i32_1 = arith.constant 0 : i32
    return %arg0, %arg1, %c0_i32, %c0_i32_0 : i32, i32, i32, i32
  }
  func.func @transform_4(%arg0: i32, %arg1: i32) -> (i32, i32, i32, i32) {
    %c0_i32 = arith.constant 0 : i32
    %c0_i32_0 = arith.constant 0 : i32
    %c0_i32_1 = arith.constant 0 : i32
    return %arg0, %arg1, %c0_i32, %c0_i32_0 : i32, i32, i32, i32
  }
}

module attributes {stable_mosaic.version = 11 : i64} {
  func.func @_bn2_relu_kernel(%arg0: i32, %arg1: i32, %arg2: memref<1x8x16x8xf32, #tpu.memory_space<vmem>>, %arg3: memref<2x8xf32, #tpu.memory_space<vmem>>, %arg4: memref<1x8x16x8xf32, #tpu.memory_space<vmem>>) attributes {dimension_semantics = [#tpu.dimension_semantics<parallel>, #tpu.dimension_semantics<parallel>], iteration_bounds = array<i64: 2, 2>, scalar_prefetch = 0 : i64, scratch_operands = 0 : i64, tpu.core_type = #tpu.core_type<tc>, window_params = [{transform_indices = @transform_0, window_bounds = array<i64: 1, 8, 16, 8>}, {pipeline_mode = #tpu.pipeline_mode<synchronous>, transform_indices = @transform_1, window_bounds = array<i64: 2, 8>}, {transform_indices = @transform_2, window_bounds = array<i64: 1, 8, 16, 8>}]} {
    %c0 = arith.constant 0 : index
    %c0_0 = arith.constant 0 : index
    %0 = vector.load %arg3[%c0, %c0_0] : memref<2x8xf32, #tpu.memory_space<vmem>>, vector<1x8xf32>
    %1 = vector.shape_cast %0 : vector<1x8xf32> to vector<1x1x8xf32>
    %c1 = arith.constant 1 : index
    %c0_1 = arith.constant 0 : index
    %2 = vector.load %arg3[%c1, %c0_1] : memref<2x8xf32, #tpu.memory_space<vmem>>, vector<1x8xf32>
    %3 = vector.shape_cast %2 : vector<1x8xf32> to vector<1x1x8xf32>
    %c0_2 = arith.constant 0 : index
    %c0_3 = arith.constant 0 : index
    %c0_4 = arith.constant 0 : index
    %c0_5 = arith.constant 0 : index
    %4 = vector.load %arg2[%c0_2, %c0_3, %c0_4, %c0_5] : memref<1x8x16x8xf32, #tpu.memory_space<vmem>>, vector<1x8x16x8xf32>
    %5 = vector.shape_cast %4 : vector<1x8x16x8xf32> to vector<8x16x8xf32>
    %6 = vector.broadcast %1 : vector<1x1x8xf32> to vector<8x16x8xf32>
    %7 = arith.mulf %5, %6 : vector<8x16x8xf32>
    %8 = vector.broadcast %3 : vector<1x1x8xf32> to vector<8x16x8xf32>
    %9 = arith.addf %7, %8 : vector<8x16x8xf32>
    %cst = arith.constant 0.000000e+00 : f32
    %10 = vector.broadcast %cst : f32 to vector<8x16x8xf32>
    %11 = arith.maximumf %9, %10 : vector<8x16x8xf32>
    %c0_6 = arith.constant 0 : index
    %c0_7 = arith.constant 0 : index
    %c0_8 = arith.constant 0 : index
    %c0_9 = arith.constant 0 : index
    %12 = vector.load %arg4[%c0_6, %c0_7, %c0_8, %c0_9] : memref<1x8x16x8xf32, #tpu.memory_space<vmem>>, vector<1x8x16x8xf32>
    %13 = vector.shape_cast %12 : vector<1x8x16x8xf32> to vector<8x16x8xf32>
    %14 = vector.shape_cast %11 : vector<8x16x8xf32> to vector<1x8x16x8xf32>
    tpu.vector_store %arg4[%c0_6, %c0_7, %c0_8, %c0_9], %14 {strides = array<i32>} : memref<1x8x16x8xf32, #tpu.memory_space<vmem>>, vector<1x8x16x8xf32>,
    return
  }
  func.func @transform_0(%arg0: i32, %arg1: i32) -> (i32, i32, i32, i32) {
    %c0_i32 = arith.constant 0 : i32
    %c0_i32_0 = arith.constant 0 : i32
    %c0_i32_1 = arith.constant 0 : i32
    return %arg0, %arg1, %c0_i32, %c0_i32_0 : i32, i32, i32, i32
  }
  func.func @transform_1(%arg0: i32, %arg1: i32) -> (i32, i32) {
    %c0_i32 = arith.constant 0 : i32
    %c0_i32_0 = arith.constant 0 : i32
    %c0_i32_1 = arith.constant 0 : i32
    return %c0_i32, %c0_i32_0 : i32, i32
  }
  func.func @transform_2(%arg0: i32, %arg1: i32) -> (i32, i32, i32, i32) {
    %c0_i32 = arith.constant 0 : i32
    %c0_i32_0 = arith.constant 0 : i32
    %c0_i32_1 = arith.constant 0 : i32
    return %arg0, %arg1, %c0_i32, %c0_i32_0 : i32, i32, i32, i32
  }
}

</mosaic_0001>

<llo_original>
// kernel: mobilenet_block.4
$region0: #{mobilenet_block.4}
  #allocation0 [shape = 'u32[]', space=smem, size = 0x4, offset = 0x4, fixed_abs, tag = 'smem constant byte address 0x4 - core index']
  #allocation1 [shape = 'u32[144,128]{1,0:T(1,128)}', space=vmem, size = 0x12000, scoped, tag = 'internal scratch']
  %s0 = inlined_call_operand.vmem [shape: f32[2,16,16,4], index: 0, kind: input, shape index: {}]
  %s1 = inlined_call_operand.vmem [shape: f32[2,4], index: 1, kind: input, shape index: {}]
  %s2 = inlined_call_operand.vmem [shape: f32[4,8], index: 2, kind: input, shape index: {}]
  %s3 = inlined_call_operand.vmem [shape: f32[2,16,16,8], index: 3, kind: output, shape index: {0}]
  %s4 = inlined_call_operand.vmem [shape: f32[2,2,2,8], index: 4, kind: output, shape index: {1}]
  %5 = xla_tuple %s3, %s4
  %s6 = sld [smem:[#allocation0]]
  $region53: #{mobilenet_block.4} parent=0
    _
  %s8 = ssub.s32 1, %s6
  %s9 = scalar_select 0, %s8, %s6
  loop: start=0, step=1, limit=6
  $region2: #{mobilenet_block.4} parent=0 // loop_pre_header
    _
  $region3: #{mobilenet_block.4} parent=0 // loop_header
    %s11 = sphi 0, %s15
    %p12 = scmp.ge.s32.totalorder %s11, 6
    %s18 = sphi 0, %s30
    %s19 = sphi 0, %s26
    %s20 = sphi 0, %s18
    %s21 = sphi 0, %s19
    %s22 = sphi 0, %s20
    %s23 = sphi 0, %s21
    %s35 = sphi 0, %s37
    %s38 = sphi 0, %s35
    %s39 = sphi 0, %s38
    %s55 = sphi 0, %s39
    %s59 = sphi 0, %s59
    %s61 = sphi 0, %s59
    %s62 = sphi 0, %s61
    %s76 = sphi 0, %s62
    %s80 = sphi 0, %s80
    %s82 = sphi 0, %s80
    %s83 = sphi 0, %s82
    %s97 = sphi 0, %s83
    %s105 = sphi 0, %s107
    %s108 = sphi 0, %s105
    %s109 = sphi 0, %s108
    %s125 = sphi 0, %s109
    %s133 = sphi 0, %s135
    %s136 = sphi 0, %s133
    %s137 = sphi 0, %s136
    %s153 = sphi 0, %s137
  $region4: #{mobilenet_block.4} parent=0 // loop_header_branch
    %14 = sbr.rel (%p12) target = $region8
  $region5: #{mobilenet_block.4} parent=0 // loop_body
    %s16 = ssub.s32 %s11, 1
    %s17 = ssub.s32 %s11, 2
    %s24 = sadd.s32 1, %s19
    %p25 = scmp.ge.s32.totalorder %s24, 2
    %s26 = scalar_select %p25, 0, %s24
    %s27 = sadd.s32 1, %s18
    %s28 = scalar_select %p25, %s27, %s18
    %p29 = scmp.ge.s32.totalorder %s28, 2
    %s30 = scalar_select %p29, 0, %s28
    %s31 = ssub.s32 %s18, %s30
    %s32 = ssub.s32 %s19, %s26
    %s33 = sor.u32 %s31, %s32
    %p34 = scmp.eq.s32.totalorder %s33, 0
    %s36 = sadd.s32 %s35, 1
    %s37 = scalar_select %p34, %s35, %s36
    %p40 = pneg %p34
    %p41 = scmp.eq.s32.totalorder %s11, 3
    %p42 = por %p40, %p41
    %p43 = scmp.ne.s32.totalorder %s35, %s38
    %p44 = scmp.eq.s32.totalorder %s11, 0
    %p45 = por %p43, %p44
    %p46 = scmp.ne.s32.totalorder %s35, %s38
    %p47 = scmp.eq.s32.totalorder %s16, 3
    %p48 = por %p46, %p47
    %p49 = scmp.ne.s32.totalorder %s38, %s39
    %p50 = scmp.eq.s32.totalorder %s16, 0
    %p51 = por %p49, %p50
    %p52 = scmp.ne.s32.totalorder %s38, %s39
    %p53 = scmp.eq.s32.totalorder %s17, 3
    %p54 = por %p52, %p53
    %p56 = scmp.ne.s32.totalorder %s39, %s55
    %p57 = scmp.eq.s32.totalorder %s17, 0
    %p58 = por %p56, %p57
    %s60 = sadd.s32 %s59, 1
    %p63 = scmp.eq.s32.totalorder %s11, 3
    %p64 = scmp.ne.s32.totalorder %s59, %s61
    %p65 = scmp.eq.s32.totalorder %s11, 0
    %p66 = por %p64, %p65
    %p67 = scmp.ne.s32.totalorder %s59, %s61
    %p68 = scmp.eq.s32.totalorder %s16, 3
    %p69 = por %p67, %p68
    %p70 = scmp.ne.s32.totalorder %s61, %s62
    %p71 = scmp.eq.s32.totalorder %s16, 0
    %p72 = por %p70, %p71
    %p73 = scmp.ne.s32.totalorder %s61, %s62
    %p74 = scmp.eq.s32.totalorder %s17, 3
    %p75 = por %p73, %p74
    %p77 = scmp.ne.s32.totalorder %s62, %s76
    %p78 = scmp.eq.s32.totalorder %s17, 0
    %p79 = por %p77, %p78
    %s81 = sadd.s32 %s80, 1
    %p84 = scmp.eq.s32.totalorder %s11, 3
    %p85 = scmp.ne.s32.totalorder %s80, %s82
    %p86 = scmp.eq.s32.totalorder %s11, 0
    %p87 = por %p85, %p86
    %p88 = scmp.ne.s32.totalorder %s80, %s82
    %p89 = scmp.eq.s32.totalorder %s16, 3
    %p90 = por %p88, %p89
    %p91 = scmp.ne.s32.totalorder %s82, %s83
    %p92 = scmp.eq.s32.totalorder %s16, 0
    %p93 = por %p91, %p92
    %p94 = scmp.ne.s32.totalorder %s82, %s83
    %p95 = scmp.eq.s32.totalorder %s17, 3
    %p96 = por %p94, %p95
    %p98 = scmp.ne.s32.totalorder %s83, %s97
    %p99 = scmp.eq.s32.totalorder %s17, 0
    %p100 = por %p98, %p99
    %s101 = ssub.s32 %s18, %s30
    %s102 = ssub.s32 %s19, %s26
    %s103 = sor.u32 %s101, %s102
    %p104 = scmp.eq.s32.totalorder %s103, 0
    %s106 = sadd.s32 %s105, 1
    %s107 = scalar_select %p104, %s105, %s106
    %p110 = pneg %p104
    %p111 = scmp.eq.s32.totalorder %s11, 3
    %p112 = por %p110, %p111
    %p113 = scmp.ne.s32.totalorder %s105, %s108
    %p114 = scmp.eq.s32.totalorder %s11, 0
    %p115 = por %p113, %p114
    %p116 = scmp.ne.s32.totalorder %s105, %s108
    %p117 = scmp.eq.s32.totalorder %s16, 3
    %p118 = por %p116, %p117
    %p119 = scmp.ne.s32.totalorder %s108, %s109
    %p120 = scmp.eq.s32.totalorder %s16, 0
    %p121 = por %p119, %p120
    %p122 = scmp.ne.s32.totalorder %s108, %s109
    %p123 = scmp.eq.s32.totalorder %s17, 3
    %p124 = por %p122, %p123
    %p126 = scmp.ne.s32.totalorder %s109, %s125
    %p127 = scmp.eq.s32.totalorder %s17, 0
    %p128 = por %p126, %p127
    %s129 = ssub.s32 %s18, %s30
    %s130 = ssub.s32 %s19, %s26
    %s131 = sor.u32 %s129, %s130
    %p132 = scmp.eq.s32.totalorder %s131, 0
    %s134 = sadd.s32 %s133, 1
    %s135 = scalar_select %p132, %s133, %s134
    %p138 = pneg %p132
    %p139 = scmp.eq.s32.totalorder %s11, 3
    %p140 = por %p138, %p139
    %p141 = scmp.ne.s32.totalorder %s133, %s136
    %p142 = scmp.eq.s32.totalorder %s11, 0
    %p143 = por %p141, %p142
    %p144 = scmp.ne.s32.totalorder %s133, %s136
    %p145 = scmp.eq.s32.totalorder %s16, 3
    %p146 = por %p144, %p145
    %p147 = scmp.ne.s32.totalorder %s136, %s137
    %p148 = scmp.eq.s32.totalorder %s16, 0
    %p149 = por %p147, %p148
    %p150 = scmp.ne.s32.totalorder %s136, %s137
    %p151 = scmp.eq.s32.totalorder %s17, 3
    %p152 = por %p150, %p151
    %p154 = scmp.ne.s32.totalorder %s137, %s153
    %p155 = scmp.eq.s32.totalorder %s17, 0
    %p156 = por %p154, %p155
    %p157 = scmp.le.s32.totalorder 1, %s11
    %p158 = scmp.lt.s32.totalorder %s11, 5
    %p159 = pnand %p157, %p158
    %p160 = pneg %p159
    // Predicated region
    $region9: #{mobilenet_block.4} parent=5 // pred_check
      _
    $region10: #{mobilenet_block.4} parent=5 // pred_check_branch
      %162 = sbr.rel (%p159) target = $region12
    $region11: #{mobilenet_block.4} parent=5 // pred_region
      %s163 = ssub.s32 %s11, 1
      // Predicated region
      $region13: #{mobilenet_block.4} parent=11 // pred_check
        %p164 = pneg %p72
      $region14: #{mobilenet_block.4} parent=11 // pred_check_branch
        %166 = sbr.rel (%p164) target = $region16
      $region15: #{mobilenet_block.4} parent=11 // pred_region
        _
      $region16: #{mobilenet_block.4} parent=11 // pred_fallthru
        _
      // Predicated region
      $region17: #{mobilenet_block.4} parent=11 // pred_check
        %p167 = pneg %p93
      $region18: #{mobilenet_block.4} parent=11 // pred_check_branch
        %169 = sbr.rel (%p167) target = $region20
      $region19: #{mobilenet_block.4} parent=11 // pred_region
        _
      $region20: #{mobilenet_block.4} parent=11 // pred_fallthru
        _
    $region12: #{mobilenet_block.4} parent=5 // pred_fallthru
      _
    %p170 = scmp.lt.s32.totalorder %s11, 4
    // Predicated region
    $region21: #{mobilenet_block.4} parent=5 // pred_check
      %p171 = pneg %p170
    $region22: #{mobilenet_block.4} parent=5 // pred_check_branch
      %173 = sbr.rel (%p171) target = $region24
    $region23: #{mobilenet_block.4} parent=5 // pred_region
      // Predicated region
      $region25: #{mobilenet_block.4} parent=23 // pred_check
        %p174 = pneg %p45
      $region26: #{mobilenet_block.4} parent=23 // pred_check_branch
        %176 = sbr.rel (%p174) target = $region28
      $region27: #{mobilenet_block.4} parent=23 // pred_region
        %s177 = smul.u32 8, %s19
        %p178 = scmp.lt.s32.totalorder %s18, 1
        %s179 = scalar_select %p178, %s18, 1
        %p180 = scmp.lt.s32.totalorder %s177, 15
        %s181 = scalar_select %p180, %s177, 15
        %s182 = smul.addr %s181, 2
        %s183 = smul.addr %s179, 32
        %s184 = sadd.s32 %s182, %s183
        %s185 = smul.addr %s184, 8
        %s186 = scalar_lea.vmem %s0, %s185
        %s187 = smul.u32 8, %s19
      $region28: #{mobilenet_block.4} parent=23 // pred_fallthru
        _
    $region24: #{mobilenet_block.4} parent=5 // pred_fallthru
      _
    %p188 = scmp.le.s32.totalorder 1, %s11
    %p189 = scmp.lt.s32.totalorder %s11, 5
    %p190 = pnand %p188, %p189
    %p191 = pneg %p190
    // Predicated region
    $region29: #{mobilenet_block.4} parent=5 // pred_check
      _
    $region30: #{mobilenet_block.4} parent=5 // pred_check_branch
      %193 = sbr.rel (%p190) target = $region32
    $region31: #{mobilenet_block.4} parent=5 // pred_region
      %s194 = ssub.s32 %s11, 1
      %s195 = smul.u32 8, %s21
      %p196 = scmp.lt.s32.totalorder %s20, 1
      %s197 = scalar_select %p196, %s20, 1
      %p198 = scmp.lt.s32.totalorder %s195, 15
      %s199 = scalar_select %p198, %s195, 15
      %s200 = smul.addr %s199, 2
      %s201 = smul.addr %s197, 32
      %s202 = sadd.s32 %s200, %s201
      %s203 = smul.addr %s202, 8
      %s204 = scalar_lea.vmem %s0, %s203
      %p205 = pneg %p51
      %p206 = pneg %p48
      %p207 = pneg %p72
      %p208 = pneg %p69
      %p209 = pneg %p93
      %p210 = pneg %p90
      %p211 = pneg %p121
      %p212 = pneg %p118
      %s213 = smul.u32 8, %s21
      %p214 = scmp.lt.s32.totalorder %s20, 1
      %s215 = scalar_select %p214, %s20, 1
      %p216 = scmp.lt.s32.totalorder %s213, 15
      %s217 = scalar_select %p216, %s213, 15
      %s218 = smul.addr %s217, 2
      %s219 = smul.addr %s215, 32
      %s220 = sadd.s32 %s218, %s219
      %s221 = smul.addr %s220, 8
      %s222 = scalar_lea.vmem %s3, %s221
      %p223 = pneg %p149
      %p224 = pneg %p146
      %p225 = scmp.lt.s32.totalorder %s20, 1
      %s226 = scalar_select %p225, %s20, 1
      %p227 = scmp.lt.s32.totalorder %s21, 1
      %s228 = scalar_select %p227, %s21, 1
      %s229 = smul.addr %s226, 2
      %s230 = sadd.s32 %s228, %s229
      %s231 = smul.addr %s230, 2
      %s232 = scalar_lea.vmem %s4, %s231
      %s233 = smul.u32 8, %s21
      %p234 = scmp.lt.s32.totalorder %s20, 1
      %s235 = scalar_select %p234, %s20, 1
      %p236 = scmp.lt.s32.totalorder %s233, 15
      %s237 = scalar_select %p236, %s233, 15
      %s238 = smul.addr %s237, 2
      %s239 = smul.addr %s235, 32
      %s240 = sadd.s32 %s238, %s239
      %s241 = smul.addr %s240, 8
      %s242 = scalar_lea.vmem %s0, %s241
      %s243 = smul.u32 8, %s21
      %s244 = smul.u32 8, %s21
      %p245 = scmp.lt.s32.totalorder %s20, 1
      %s246 = scalar_select %p245, %s20, 1
      %p247 = scmp.lt.s32.totalorder %s244, 15
      %s248 = scalar_select %p247, %s244, 15
      %s249 = smul.addr %s248, 2
      %s250 = smul.addr %s246, 32
      %s251 = sadd.s32 %s249, %s250
      %s252 = smul.addr %s251, 8
      %s253 = scalar_lea.vmem %s3, %s252
      %s254 = smul.u32 8, %s21
      %p255 = scmp.lt.s32.totalorder %s20, 1
      %s256 = scalar_select %p255, %s20, 1
      %p257 = scmp.lt.s32.totalorder %s21, 1
      %s258 = scalar_select %p257, %s21, 1
      %s259 = smul.addr %s256, 2
      %s260 = sadd.s32 %s258, %s259
      %s261 = smul.addr %s260, 2
      %s262 = scalar_lea.vmem %s4, %s261
      %v263 = vld [vmem:[%s1] sm:$0x1]
      %v264 = vld [vmem:[%s1 + $0x1] sm:$0x1]
      %v265 = vld [vmem:[%s242] sm:$0xff]
      %v266 = vld [vmem:[%s242 + $0x8] sm:$0xff]
      %v267 = vld [vmem:[%s242 + $0x10] sm:$0xff]
      %v268 = vld [vmem:[%s242 + $0x18] sm:$0xff]
      %v269 = vld [vmem:[%s242 + $0x20] sm:$0xff]
      %v270 = vld [vmem:[%s242 + $0x28] sm:$0xff]
      %v271 = vld [vmem:[%s242 + $0x30] sm:$0xff]
      %v272 = vld [vmem:[%s242 + $0x38] sm:$0xff]
      %v273 = vld [vmem:[%s242 + $0x40] sm:$0xff]
      %v274 = vld [vmem:[%s242 + $0x48] sm:$0xff]
      %v275 = vld [vmem:[%s242 + $0x50] sm:$0xff]
      %v276 = vld [vmem:[%s242 + $0x58] sm:$0xff]
      %v277 = vld [vmem:[%s242 + $0x60] sm:$0xff]
      %v278 = vld [vmem:[%s242 + $0x68] sm:$0xff]
      %v279 = vld [vmem:[%s242 + $0x70] sm:$0xff]
      %v280 = vld [vmem:[%s242 + $0x78] sm:$0xff]
      %v281 = vlaneseq
      %v282 = vshrl.u32 %v281, 7
      %v283 = vsub.s32 0, %v282
      %v284 = vrot.slane %v263, %v283
      %v285 = vmul.f32 %v265, %v284
      %v286 = vmul.f32 %v266, %v284
      %v287 = vmul.f32 %v267, %v284
      %v288 = vmul.f32 %v268, %v284
      %v289 = vmul.f32 %v269, %v284
      %v290 = vmul.f32 %v270, %v284
      %v291 = vmul.f32 %v271, %v284
      %v292 = vmul.f32 %v272, %v284
      %v293 = vmul.f32 %v273, %v284
      %v294 = vmul.f32 %v274, %v284
      %v295 = vmul.f32 %v275, %v284
      %v296 = vmul.f32 %v276, %v284
      %v297 = vmul.f32 %v277, %v284
      %v298 = vmul.f32 %v278, %v284
      %v299 = vmul.f32 %v279, %v284
      %v300 = vmul.f32 %v280, %v284
      %v301 = vlaneseq
      %v302 = vshrl.u32 %v301, 7
      %v303 = vsub.s32 0, %v302
      %v304 = vrot.slane %v264, %v303
      %v305 = vadd.f32 %v285, %v304
      %v306 = vadd.f32 %v286, %v304
      %v307 = vadd.f32 %v287, %v304
      %v308 = vadd.f32 %v288, %v304
      %v309 = vadd.f32 %v289, %v304
      %v310 = vadd.f32 %v290, %v304
      %v311 = vadd.f32 %v291, %v304
      %v312 = vadd.f32 %v292, %v304
      %v313 = vadd.f32 %v293, %v304
      %v314 = vadd.f32 %v294, %v304
      %v315 = vadd.f32 %v295, %v304
      %v316 = vadd.f32 %v296, %v304
      %v317 = vadd.f32 %v297, %v304
      %v318 = vadd.f32 %v298, %v304
      %v319 = vadd.f32 %v299, %v304
      %v320 = vadd.f32 %v300, %v304
      %v321 = vmax.f32 %v305, 0.0
      %v322 = vmax.f32 %v306, 0.0
      %v323 = vmax.f32 %v307, 0.0
      %v324 = vmax.f32 %v308, 0.0
      %v325 = vmax.f32 %v309, 0.0
      %v326 = vmax.f32 %v310, 0.0
      %v327 = vmax.f32 %v311, 0.0
      %v328 = vmax.f32 %v312, 0.0
      %v329 = vmax.f32 %v313, 0.0
      %v330 = vmax.f32 %v314, 0.0
      %v331 = vmax.f32 %v315, 0.0
      %v332 = vmax.f32 %v316, 0.0
      %v333 = vmax.f32 %v317, 0.0
      %v334 = vmax.f32 %v318, 0.0
      %v335 = vmax.f32 %v319, 0.0
      %v336 = vmax.f32 %v320, 0.0
      %v337 = vld [vmem:[%s2] sm:$0xf]
      %vm338 = vcmask 31744
      %v340 = vsel %vm338, %v321, 0
      %v343 = vsel %vm338, %v322, 0
      %v346 = vsel %vm338, %v323, 0
      %v349 = vsel %vm338, %v324, 0
      %v352 = vsel %vm338, %v325, 0
      %v355 = vsel %vm338, %v326, 0
      %v358 = vsel %vm338, %v327, 0
      %v361 = vsel %vm338, %v328, 0
      %v364 = vsel %vm338, %v329, 0
      %v367 = vsel %vm338, %v330, 0
      %v370 = vsel %vm338, %v331, 0
      %v373 = vsel %vm338, %v332, 0
      %v376 = vsel %vm338, %v333, 0
      %v379 = vsel %vm338, %v334, 0
      %v382 = vsel %vm338, %v335, 0
      %v385 = vsel %vm338, %v336, 0
      %vm387 = vcmask 1043456
      %v389 = vsel %vm387, %v337, 0
      %391 = vmatprep.subr.mxu0 0.0
      %392 = vmatpush1.msra.mxu0 %v389
      %393 = vmatprep.subr.mxu0 0.0
      %394 = vmatpush1.msra.mxu0 0.0
      %395 = vmatprep.subr.mxu0 0.0
      %396 = vmatpush1.msra.mxu0 0.0
      %397 = vmatprep.subr.mxu0 0.0
      %398 = vmatpush1.msra.mxu0 0.0
      %399 = vmatprep.subr.mxu0 0.0
      %400 = vmatpush1.msra.mxu0 0.0
      %401 = vmatprep.subr.mxu0 0.0
      %402 = vmatpush1.msra.mxu0 0.0
      %403 = vmatprep.subr.mxu0 0.0
      %404 = vmatpush1.msra.mxu0 0.0
      %405 = vmatprep.subr.mxu0 0.0
      %406 = vmatpush1.msra.mxu0 0.0
      %407 = vmatprep.subr.mxu0 0.0
      %408 = vmatpush1.msra.mxu0 0.0
      %409 = vmatprep.subr.mxu0 0.0
      %410 = vmatpush1.msra.mxu0 0.0
      %411 = vmatprep.subr.mxu0 0.0
      %412 = vmatpush1.msra.mxu0 0.0
      %413 = vmatprep.subr.mxu0 0.0
      %414 = vmatpush1.msra.mxu0 0.0
      %415 = vmatprep.subr.mxu0 0.0
      %416 = vmatpush1.msra.mxu0 0.0
      %417 = vmatprep.subr.mxu0 0.0
      %418 = vmatpush1.msra.mxu0 0.0
      %419 = vmatprep.subr.mxu0 0.0
      %420 = vmatpush1.msra.mxu0 0.0
      %421 = vmatprep.subr.mxu0 0.0
      %422 = vmatpush1.msra.mxu0 0.0
      %423 = vmatprep.subr.mxu0 0.0
      %424 = vmatpush1.msra.mxu0 0.0
      %425 = vmatprep.subr.mxu0 0.0
      %426 = vmatpush1.msra.mxu0 0.0
      %427 = vmatprep.subr.mxu0 0.0
      %428 = vmatpush1.msra.mxu0 0.0
      %429 = vmatprep.subr.mxu0 0.0
      %430 = vmatpush1.msra.mxu0 0.0
      %431 = vmatprep.subr.mxu0 0.0
      %432 = vmatpush1.msra.mxu0 0.0
      %433 = vmatprep.subr.mxu0 0.0
      %434 = vmatpush1.msra.mxu0 0.0
      %435 = vmatprep.subr.mxu0 0.0
      %436 = vmatpush1.msra.mxu0 0.0
      %437 = vmatprep.subr.mxu0 0.0
      %438 = vmatpush1.msra.mxu0 0.0
      %439 = vmatprep.subr.mxu0 0.0
      %440 = vmatpush1.msra.mxu0 0.0
      %441 = vmatprep.subr.mxu0 0.0
      %442 = vmatpush1.msra.mxu0 0.0
      %443 = vmatprep.subr.mxu0 0.0
      %444 = vmatpush1.msra.mxu0 0.0
      %445 = vmatprep.subr.mxu0 0.0
      %446 = vmatpush1.msra.mxu0 0.0
      %447 = vmatprep.subr.mxu0 0.0
      %448 = vmatpush1.msra.mxu0 0.0
      %449 = vmatprep.subr.mxu0 0.0
      %450 = vmatpush1.msra.mxu0 0.0
      %451 = vmatprep.subr.mxu0 0.0
      %452 = vmatpush1.msra.mxu0 0.0
      %453 = vmatprep.subr.mxu0 0.0
      %454 = vmatpush1.msra.mxu0 0.0
      %455 = vmatprep.mubr.f32.mxu0 0.0
      %456 = vmatmul.mubr.f32.gmra.mrb[0].mxu0 %v340
      %v457 = vpop.f32.mrb[0].mxu0
      %v458 = vadd.f32 0.0, %v457
      %v459 = vpop.f32.mrb[0].mxu0
      %460 = vmatprep.mubr.f32.mxu0 0.0
      %461 = vmatmul.mubr.f32.gmra.mrb[0].mxu0 %v343
      %v462 = vpop.f32.mrb[0].mxu0
      %v463 = vadd.f32 0.0, %v462
      %v464 = vpop.f32.mrb[0].mxu0
      %465 = vmatprep.mubr.f32.mxu0 0.0
      %466 = vmatmul.mubr.f32.gmra.mrb[0].mxu0 %v346
      %v467 = vpop.f32.mrb[0].mxu0
      %v468 = vadd.f32 0.0, %v467
      %v469 = vpop.f32.mrb[0].mxu0
      %470 = vmatprep.mubr.f32.mxu0 0.0
      %471 = vmatmul.mubr.f32.gmra.mrb[0].mxu0 %v349
      %v472 = vpop.f32.mrb[0].mxu0
      %v473 = vadd.f32 0.0, %v472
      %v474 = vpop.f32.mrb[0].mxu0
      %475 = vmatprep.mubr.f32.mxu0 0.0
      %476 = vmatmul.mubr.f32.gmra.mrb[0].mxu0 %v352
      %v477 = vpop.f32.mrb[0].mxu0
      %v478 = vadd.f32 0.0, %v477
      %v479 = vpop.f32.mrb[0].mxu0
      %480 = vmatprep.mubr.f32.mxu0 0.0
      %481 = vmatmul.mubr.f32.gmra.mrb[0].mxu0 %v355
      %v482 = vpop.f32.mrb[0].mxu0
      %v483 = vadd.f32 0.0, %v482
      %v484 = vpop.f32.mrb[0].mxu0
      %485 = vmatprep.mubr.f32.mxu0 0.0
      %486 = vmatmul.mubr.f32.gmra.mrb[0].mxu0 %v358
      %v487 = vpop.f32.mrb[0].mxu0
      %v488 = vadd.f32 0.0, %v487
      %v489 = vpop.f32.mrb[0].mxu0
      %490 = vmatprep.mubr.f32.mxu0 0.0
      %491 = vmatmul.mubr.f32.gmra.mrb[0].mxu0 %v361
      %v492 = vpop.f32.mrb[0].mxu0
      %v493 = vadd.f32 0.0, %v492
      %v494 = vpop.f32.mrb[0].mxu0
      %495 = vmatprep.mubr.f32.mxu0 0.0
      %496 = vmatmul.mubr.f32.gmra.mrb[0].mxu0 %v364
      %v497 = vpop.f32.mrb[0].mxu0
      %v498 = vadd.f32 0.0, %v497
      %v499 = vpop.f32.mrb[0].mxu0
      %500 = vmatprep.mubr.f32.mxu0 0.0
      %501 = vmatmul.mubr.f32.gmra.mrb[0].mxu0 %v367
      %v502 = vpop.f32.mrb[0].mxu0
      %v503 = vadd.f32 0.0, %v502
      %v504 = vpop.f32.mrb[0].mxu0
      %505 = vmatprep.mubr.f32.mxu0 0.0
      %506 = vmatmul.mubr.f32.gmra.mrb[0].mxu0 %v370
      %v507 = vpop.f32.mrb[0].mxu0
      %v508 = vadd.f32 0.0, %v507
      %v509 = vpop.f32.mrb[0].mxu0
      %510 = vmatprep.mubr.f32.mxu0 0.0
      %511 = vmatmul.mubr.f32.gmra.mrb[0].mxu0 %v373
      %v512 = vpop.f32.mrb[0].mxu0
      %v513 = vadd.f32 0.0, %v512
      %v514 = vpop.f32.mrb[0].mxu0
      %515 = vmatprep.mubr.f32.mxu0 0.0
      %516 = vmatmul.mubr.f32.gmra.mrb[0].mxu0 %v376
      %v517 = vpop.f32.mrb[0].mxu0
      %v518 = vadd.f32 0.0, %v517
      %v519 = vpop.f32.mrb[0].mxu0
      %520 = vmatprep.mubr.f32.mxu0 0.0
      %521 = vmatmul.mubr.f32.gmra.mrb[0].mxu0 %v379
      %v522 = vpop.f32.mrb[0].mxu0
      %v523 = vadd.f32 0.0, %v522
      %v524 = vpop.f32.mrb[0].mxu0
      %525 = vmatprep.mubr.f32.mxu0 0.0
      %526 = vmatmul.mubr.f32.gmra.mrb[0].mxu0 %v382
      %v527 = vpop.f32.mrb[0].mxu0
      %v528 = vadd.f32 0.0, %v527
      %v529 = vpop.f32.mrb[0].mxu0
      %530 = vmatprep.mubr.f32.mxu0 0.0
      %531 = vmatmul.mubr.f32.gmra.mrb[0].mxu0 %v385
      %v532 = vpop.f32.mrb[0].mxu0
      %v533 = vadd.f32 0.0, %v532
      %v534 = vpop.f32.mrb[0].mxu0
      %535 = vdwg.mxu0
      %vm536 = vcmask 64512
      %537 = vst.msk [vmem:[%s253] sm:$0xff] %vm536, %v458
      %538 = vst.msk [vmem:[%s253 + $0x8] sm:$0xff] %vm536, %v463
      %539 = vst.msk [vmem:[%s253 + $0x10] sm:$0xff] %vm536, %v468
      %540 = vst.msk [vmem:[%s253 + $0x18] sm:$0xff] %vm536, %v473
      %541 = vst.msk [vmem:[%s253 + $0x20] sm:$0xff] %vm536, %v478
      %542 = vst.msk [vmem:[%s253 + $0x28] sm:$0xff] %vm536, %v483
      %543 = vst.msk [vmem:[%s253 + $0x30] sm:$0xff] %vm536, %v488
      %544 = vst.msk [vmem:[%s253 + $0x38] sm:$0xff] %vm536, %v493
      %545 = vst.msk [vmem:[%s253 + $0x40] sm:$0xff] %vm536, %v498
      %546 = vst.msk [vmem:[%s253 + $0x48] sm:$0xff] %vm536, %v503
      %547 = vst.msk [vmem:[%s253 + $0x50] sm:$0xff] %vm536, %v508
      %548 = vst.msk [vmem:[%s253 + $0x58] sm:$0xff] %vm536, %v513
      %549 = vst.msk [vmem:[%s253 + $0x60] sm:$0xff] %vm536, %v518
      %550 = vst.msk [vmem:[%s253 + $0x68] sm:$0xff] %vm536, %v523
      %551 = vst.msk [vmem:[%s253 + $0x70] sm:$0xff] %vm536, %v528
      %552 = vst.msk [vmem:[%s253 + $0x78] sm:$0xff] %vm536, %v533
      %v553 = vsel %vm536, %v458, 0.0
      %v554 = vsel %vm536, %v463, 0.0
      %v555 = vadd.f32 %v553, %v554
      %v556 = vsel %vm536, %v468, 0.0
      %v557 = vadd.f32 %v555, %v556
      %v558 = vsel %vm536, %v473, 0.0
      %v559 = vadd.f32 %v557, %v558
      %v560 = vsel %vm536, %v478, 0.0
      %v561 = vadd.f32 %v559, %v560
      %v562 = vsel %vm536, %v483, 0.0
      %v563 = vadd.f32 %v561, %v562
      %v564 = vsel %vm536, %v488, 0.0
      %v565 = vadd.f32 %v563, %v564
      %v566 = vsel %vm536, %v493, 0.0
      %v567 = vadd.f32 %v565, %v566
      %v568 = vsel %vm536, %v498, 0.0
      %v569 = vadd.f32 %v567, %v568
      %v570 = vsel %vm536, %v503, 0.0
      %v571 = vadd.f32 %v569, %v570
      %v572 = vsel %vm536, %v508, 0.0
      %v573 = vadd.f32 %v571, %v572
      %v574 = vsel %vm536, %v513, 0.0
      %v575 = vadd.f32 %v573, %v574
      %v576 = vsel %vm536, %v518, 0.0
      %v577 = vadd.f32 %v575, %v576
      %v578 = vsel %vm536, %v523, 0.0
      %v579 = vadd.f32 %v577, %v578
      %v580 = vsel %vm536, %v528, 0.0
      %v581 = vadd.f32 %v579, %v580
      %v582 = vsel %vm536, %v533, 0.0
      %v583 = vadd.f32 %v581, %v582
      %v584 = vrot.slane %v583, 4
      %v585 = vadd.f32 %v583, %v584
      %v586 = vrot.slane %v585, 2
      %v587 = vadd.f32 %v585, %v586
      %v588 = vrot.slane %v587, 1
      %v589 = vadd.f32 %v587, %v588
      %vm590 = vcmask 57344
      %591 = vst.msk [vmem:[%s262] sm:$0x1] %vm590, %v589
      %v592 = vmul.f32 %v458, %v458
      %v593 = vmul.f32 %v463, %v463
      %v594 = vmul.f32 %v468, %v468
      %v595 = vmul.f32 %v473, %v473
      %v596 = vmul.f32 %v478, %v478
      %v597 = vmul.f32 %v483, %v483
      %v598 = vmul.f32 %v488, %v488
      %v599 = vmul.f32 %v493, %v493
      %v600 = vmul.f32 %v498, %v498
      %v601 = vmul.f32 %v503, %v503
      %v602 = vmul.f32 %v508, %v508
      %v603 = vmul.f32 %v513, %v513
      %v604 = vmul.f32 %v518, %v518
      %v605 = vmul.f32 %v523, %v523
      %v606 = vmul.f32 %v528, %v528
      %v607 = vmul.f32 %v533, %v533
      %v608 = vsel %vm536, %v592, 0.0
      %v609 = vsel %vm536, %v593, 0.0
      %v610 = vadd.f32 %v608, %v609
      %v611 = vsel %vm536, %v594, 0.0
      %v612 = vadd.f32 %v610, %v611
      %v613 = vsel %vm536, %v595, 0.0
      %v614 = vadd.f32 %v612, %v613
      %v615 = vsel %vm536, %v596, 0.0
      %v616 = vadd.f32 %v614, %v615
      %v617 = vsel %vm536, %v597, 0.0
      %v618 = vadd.f32 %v616, %v617
      %v619 = vsel %vm536, %v598, 0.0
      %v620 = vadd.f32 %v618, %v619
      %v621 = vsel %vm536, %v599, 0.0
      %v622 = vadd.f32 %v620, %v621
      %v623 = vsel %vm536, %v600, 0.0
      %v624 = vadd.f32 %v622, %v623
      %v625 = vsel %vm536, %v601, 0.0
      %v626 = vadd.f32 %v624, %v625
      %v627 = vsel %vm536, %v602, 0.0
      %v628 = vadd.f32 %v626, %v627
      %v629 = vsel %vm536, %v603, 0.0
      %v630 = vadd.f32 %v628, %v629
      %v631 = vsel %vm536, %v604, 0.0
      %v632 = vadd.f32 %v630, %v631
      %v633 = vsel %vm536, %v605, 0.0
      %v634 = vadd.f32 %v632, %v633
      %v635 = vsel %vm536, %v606, 0.0
      %v636 = vadd.f32 %v634, %v635
      %v637 = vsel %vm536, %v607, 0.0
      %v638 = vadd.f32 %v636, %v637
      %v639 = vrot.slane %v638, 4
      %v640 = vadd.f32 %v638, %v639
      %v641 = vrot.slane %v640, 2
      %v642 = vadd.f32 %v640, %v641
      %v643 = vrot.slane %v642, 1
      %v644 = vadd.f32 %v642, %v643
      %645 = vst.msk [vmem:[%s262 + $0x1] sm:$0x1] %vm590, %v644
      %s646 = smul.u32 8, %s21
      %p647 = scmp.lt.s32.totalorder %s20, 1
      %s648 = scalar_select %p647, %s20, 1
      %p649 = scmp.lt.s32.totalorder %s646, 15
      %s650 = scalar_select %p649, %s646, 15
      %s651 = smul.addr %s650, 2
      %s652 = smul.addr %s648, 32
      %s653 = sadd.s32 %s651, %s652
      %s654 = smul.addr %s653, 8
      %s655 = scalar_lea.vmem %s3, %s654
      %p656 = scmp.lt.s32.totalorder %s20, 1
      %s657 = scalar_select %p656, %s20, 1
      %p658 = scmp.lt.s32.totalorder %s21, 1
      %s659 = scalar_select %p658, %s21, 1
      %s660 = smul.addr %s657, 2
      %s661 = sadd.s32 %s659, %s660
      %s662 = smul.addr %s661, 2
      %s663 = scalar_lea.vmem %s4, %s662
      // Predicated region
      $region33: #{mobilenet_block.4} parent=31 // pred_check
        %p664 = pneg %p118
      $region34: #{mobilenet_block.4} parent=31 // pred_check_branch
        %666 = sbr.rel (%p664) target = $region36
      $region35: #{mobilenet_block.4} parent=31 // pred_region
        %s667 = smul.u32 8, %s21
      $region36: #{mobilenet_block.4} parent=31 // pred_fallthru
        _
      // Predicated region
      $region37: #{mobilenet_block.4} parent=31 // pred_check
        %p668 = pneg %p146
      $region38: #{mobilenet_block.4} parent=31 // pred_check_branch
        %670 = sbr.rel (%p668) target = $region40
      $region39: #{mobilenet_block.4} parent=31 // pred_region
        _
      $region40: #{mobilenet_block.4} parent=31 // pred_fallthru
        _
    $region32: #{mobilenet_block.4} parent=5 // pred_fallthru
      _
    %p671 = scmp.le.s32.totalorder 2, %s11
    // Predicated region
    $region41: #{mobilenet_block.4} parent=5 // pred_check
      %p672 = pneg %p671
    $region42: #{mobilenet_block.4} parent=5 // pred_check_branch
      %674 = sbr.rel (%p672) target = $region44
    $region43: #{mobilenet_block.4} parent=5 // pred_region
      %s675 = ssub.s32 %s11, 2
      // Predicated region
      $region45: #{mobilenet_block.4} parent=43 // pred_check
        %p676 = pneg %p124
      $region46: #{mobilenet_block.4} parent=43 // pred_check_branch
        %678 = sbr.rel (%p676) target = $region48
      $region47: #{mobilenet_block.4} parent=43 // pred_region
        %s679 = smul.u32 8, %s23
        %p680 = scmp.lt.s32.totalorder %s22, 1
        %s681 = scalar_select %p680, %s22, 1
        %p682 = scmp.lt.s32.totalorder %s679, 15
        %s683 = scalar_select %p682, %s679, 15
        %s684 = smul.addr %s683, 2
        %s685 = smul.addr %s681, 32
        %s686 = sadd.s32 %s684, %s685
        %s687 = smul.addr %s686, 8
        %s688 = scalar_lea.vmem %s3, %s687
      $region48: #{mobilenet_block.4} parent=43 // pred_fallthru
        _
      // Predicated region
      $region49: #{mobilenet_block.4} parent=43 // pred_check
        %p689 = pneg %p152
      $region50: #{mobilenet_block.4} parent=43 // pred_check_branch
        %691 = sbr.rel (%p689) target = $region52
      $region51: #{mobilenet_block.4} parent=43 // pred_region
        %p692 = scmp.lt.s32.totalorder %s22, 1
        %s693 = scalar_select %p692, %s22, 1
        %p694 = scmp.lt.s32.totalorder %s23, 1
        %s695 = scalar_select %p694, %s23, 1
        %s696 = smul.addr %s693, 2
        %s697 = sadd.s32 %s695, %s696
        %s698 = smul.addr %s697, 2
        %s699 = scalar_lea.vmem %s4, %s698
      $region52: #{mobilenet_block.4} parent=43 // pred_fallthru
        _
    $region44: #{mobilenet_block.4} parent=5 // pred_fallthru
      _
  $region6: #{mobilenet_block.4} parent=0 // loop_footer
    %s15 = sadd.s32 1, %s11
  $region7: #{mobilenet_block.4} parent=0 // loop_footer_branch
    %10 = sbr.rel target = $region3
  $region8: #{mobilenet_block.4} parent=0 // loop_exit
    _

// kernel: mobilenet_block.5
$region0: #{mobilenet_block.5}
  #allocation0 [shape = 'u32[]', space=smem, size = 0x4, offset = 0x4, fixed_abs, tag = 'smem constant byte address 0x4 - core index']
  #allocation1 [shape = 'u32[144,128]{1,0:T(1,128)}', space=vmem, size = 0x12000, scoped, tag = 'internal scratch']
  %s0 = inlined_call_operand.vmem [shape: f32[2,16,16,8], index: 0, kind: input, shape index: {}, may-alias: {0,2}]
  %s1 = inlined_call_operand.vmem [shape: f32[2,8], index: 1, kind: input, shape index: {}]
  %s2 = inlined_call_operand.vmem [shape: f32[2,16,16,8], index: 2, kind: output, shape index: {}, may-alias: {0,2}]
  %s3 = sld [smem:[#allocation0]]
  $region41: #{mobilenet_block.5} parent=0
    _
  %s5 = ssub.s32 1, %s3
  %s6 = scalar_select 0, %s5, %s3
  loop: start=0, step=1, limit=6
  $region2: #{mobilenet_block.5} parent=0 // loop_pre_header
    _
  $region3: #{mobilenet_block.5} parent=0 // loop_header
    %s8 = sphi 0, %s12
    %p9 = scmp.ge.s32.totalorder %s8, 6
    %s15 = sphi 0, %s27
    %s16 = sphi 0, %s23
    %s17 = sphi 0, %s15
    %s18 = sphi 0, %s16
    %s19 = sphi 0, %s17
    %s20 = sphi 0, %s18
    %s32 = sphi 0, %s34
    %s35 = sphi 0, %s32
    %s36 = sphi 0, %s35
    %s52 = sphi 0, %s36
    %s56 = sphi 0, %s56
    %s58 = sphi 0, %s56
    %s59 = sphi 0, %s58
    %s73 = sphi 0, %s59
    %s81 = sphi 0, %s83
    %s84 = sphi 0, %s81
    %s85 = sphi 0, %s84
    %s101 = sphi 0, %s85
  $region4: #{mobilenet_block.5} parent=0 // loop_header_branch
    %11 = sbr.rel (%p9) target = $region8
  $region5: #{mobilenet_block.5} parent=0 // loop_body
    %s13 = ssub.s32 %s8, 1
    %s14 = ssub.s32 %s8, 2
    %s21 = sadd.s32 1, %s16
    %p22 = scmp.ge.s32.totalorder %s21, 2
    %s23 = scalar_select %p22, 0, %s21
    %s24 = sadd.s32 1, %s15
    %s25 = scalar_select %p22, %s24, %s15
    %p26 = scmp.ge.s32.totalorder %s25, 2
    %s27 = scalar_select %p26, 0, %s25
    %s28 = ssub.s32 %s15, %s27
    %s29 = ssub.s32 %s16, %s23
    %s30 = sor.u32 %s28, %s29
    %p31 = scmp.eq.s32.totalorder %s30, 0
    %s33 = sadd.s32 %s32, 1
    %s34 = scalar_select %p31, %s32, %s33
    %p37 = pneg %p31
    %p38 = scmp.eq.s32.totalorder %s8, 3
    %p39 = por %p37, %p38
    %p40 = scmp.ne.s32.totalorder %s32, %s35
    %p41 = scmp.eq.s32.totalorder %s8, 0
    %p42 = por %p40, %p41
    %p43 = scmp.ne.s32.totalorder %s32, %s35
    %p44 = scmp.eq.s32.totalorder %s13, 3
    %p45 = por %p43, %p44
    %p46 = scmp.ne.s32.totalorder %s35, %s36
    %p47 = scmp.eq.s32.totalorder %s13, 0
    %p48 = por %p46, %p47
    %p49 = scmp.ne.s32.totalorder %s35, %s36
    %p50 = scmp.eq.s32.totalorder %s14, 3
    %p51 = por %p49, %p50
    %p53 = scmp.ne.s32.totalorder %s36, %s52
    %p54 = scmp.eq.s32.totalorder %s14, 0
    %p55 = por %p53, %p54
    %s57 = sadd.s32 %s56, 1
    %p60 = scmp.eq.s32.totalorder %s8, 3
    %p61 = scmp.ne.s32.totalorder %s56, %s58
    %p62 = scmp.eq.s32.totalorder %s8, 0
    %p63 = por %p61, %p62
    %p64 = scmp.ne.s32.totalorder %s56, %s58
    %p65 = scmp.eq.s32.totalorder %s13, 3
    %p66 = por %p64, %p65
    %p67 = scmp.ne.s32.totalorder %s58, %s59
    %p68 = scmp.eq.s32.totalorder %s13, 0
    %p69 = por %p67, %p68
    %p70 = scmp.ne.s32.totalorder %s58, %s59
    %p71 = scmp.eq.s32.totalorder %s14, 3
    %p72 = por %p70, %p71
    %p74 = scmp.ne.s32.totalorder %s59, %s73
    %p75 = scmp.eq.s32.totalorder %s14, 0
    %p76 = por %p74, %p75
    %s77 = ssub.s32 %s15, %s27
    %s78 = ssub.s32 %s16, %s23
    %s79 = sor.u32 %s77, %s78
    %p80 = scmp.eq.s32.totalorder %s79, 0
    %s82 = sadd.s32 %s81, 1
    %s83 = scalar_select %p80, %s81, %s82
    %p86 = pneg %p80
    %p87 = scmp.eq.s32.totalorder %s8, 3
    %p88 = por %p86, %p87
    %p89 = scmp.ne.s32.totalorder %s81, %s84
    %p90 = scmp.eq.s32.totalorder %s8, 0
    %p91 = por %p89, %p90
    %p92 = scmp.ne.s32.totalorder %s81, %s84
    %p93 = scmp.eq.s32.totalorder %s13, 3
    %p94 = por %p92, %p93
    %p95 = scmp.ne.s32.totalorder %s84, %s85
    %p96 = scmp.eq.s32.totalorder %s13, 0
    %p97 = por %p95, %p96
    %p98 = scmp.ne.s32.totalorder %s84, %s85
    %p99 = scmp.eq.s32.totalorder %s14, 3
    %p100 = por %p98, %p99
    %p102 = scmp.ne.s32.totalorder %s85, %s101
    %p103 = scmp.eq.s32.totalorder %s14, 0
    %p104 = por %p102, %p103
    %p105 = scmp.le.s32.totalorder 1, %s8
    %p106 = scmp.lt.s32.totalorder %s8, 5
    %p107 = pnand %p105, %p106
    %p108 = pneg %p107
    // Predicated region
    $region9: #{mobilenet_block.5} parent=5 // pred_check
      _
    $region10: #{mobilenet_block.5} parent=5 // pred_check_branch
      %110 = sbr.rel (%p107) target = $region12
    $region11: #{mobilenet_block.5} parent=5 // pred_region
      %s111 = ssub.s32 %s8, 1
      // Predicated region
      $region13: #{mobilenet_block.5} parent=11 // pred_check
        %p112 = pneg %p69
      $region14: #{mobilenet_block.5} parent=11 // pred_check_branch
        %114 = sbr.rel (%p112) target = $region16
      $region15: #{mobilenet_block.5} parent=11 // pred_region
        _
      $region16: #{mobilenet_block.5} parent=11 // pred_fallthru
        _
    $region12: #{mobilenet_block.5} parent=5 // pred_fallthru
      _
    %p115 = scmp.lt.s32.totalorder %s8, 4
    // Predicated region
    $region17: #{mobilenet_block.5} parent=5 // pred_check
      %p116 = pneg %p115
    $region18: #{mobilenet_block.5} parent=5 // pred_check_branch
      %118 = sbr.rel (%p116) target = $region20
    $region19: #{mobilenet_block.5} parent=5 // pred_region
      // Predicated region
      $region21: #{mobilenet_block.5} parent=19 // pred_check
        %p119 = pneg %p42
      $region22: #{mobilenet_block.5} parent=19 // pred_check_branch
        %121 = sbr.rel (%p119) target = $region24
      $region23: #{mobilenet_block.5} parent=19 // pred_region
        %s122 = smul.u32 8, %s16
        %p123 = scmp.lt.s32.totalorder %s15, 1
        %s124 = scalar_select %p123, %s15, 1
        %p125 = scmp.lt.s32.totalorder %s122, 15
        %s126 = scalar_select %p125, %s122, 15
        %s127 = smul.addr %s126, 2
        %s128 = smul.addr %s124, 32
        %s129 = sadd.s32 %s127, %s128
        %s130 = smul.addr %s129, 8
        %s131 = scalar_lea.vmem %s0, %s130
        %s132 = smul.u32 8, %s16
      $region24: #{mobilenet_block.5} parent=19 // pred_fallthru
        _
    $region20: #{mobilenet_block.5} parent=5 // pred_fallthru
      _
    %p133 = scmp.le.s32.totalorder 1, %s8
    %p134 = scmp.lt.s32.totalorder %s8, 5
    %p135 = pnand %p133, %p134
    %p136 = pneg %p135
    // Predicated region
    $region25: #{mobilenet_block.5} parent=5 // pred_check
      _
    $region26: #{mobilenet_block.5} parent=5 // pred_check_branch
      %138 = sbr.rel (%p135) target = $region28
    $region27: #{mobilenet_block.5} parent=5 // pred_region
      %s139 = ssub.s32 %s8, 1
      %s140 = smul.u32 8, %s18
      %p141 = scmp.lt.s32.totalorder %s17, 1
      %s142 = scalar_select %p141, %s17, 1
      %p143 = scmp.lt.s32.totalorder %s140, 15
      %s144 = scalar_select %p143, %s140, 15
      %s145 = smul.addr %s144, 2
      %s146 = smul.addr %s142, 32
      %s147 = sadd.s32 %s145, %s146
      %s148 = smul.addr %s147, 8
      %s149 = scalar_lea.vmem %s0, %s148
      %p150 = pneg %p48
      %p151 = pneg %p45
      %p152 = pneg %p69
      %p153 = pneg %p66
      %p154 = pneg %p97
      %p155 = pneg %p94
      %s156 = smul.u32 8, %s18
      %p157 = scmp.lt.s32.totalorder %s17, 1
      %s158 = scalar_select %p157, %s17, 1
      %p159 = scmp.lt.s32.totalorder %s156, 15
      %s160 = scalar_select %p159, %s156, 15
      %s161 = smul.addr %s160, 2
      %s162 = smul.addr %s158, 32
      %s163 = sadd.s32 %s161, %s162
      %s164 = smul.addr %s163, 8
      %s165 = scalar_lea.vmem %s2, %s164
      %s166 = smul.u32 8, %s18
      %p167 = scmp.lt.s32.totalorder %s17, 1
      %s168 = scalar_select %p167, %s17, 1
      %p169 = scmp.lt.s32.totalorder %s166, 15
      %s170 = scalar_select %p169, %s166, 15
      %s171 = smul.addr %s170, 2
      %s172 = smul.addr %s168, 32
      %s173 = sadd.s32 %s171, %s172
      %s174 = smul.addr %s173, 8
      %s175 = scalar_lea.vmem %s0, %s174
      %s176 = smul.u32 8, %s18
      %s177 = smul.u32 8, %s18
      %p178 = scmp.lt.s32.totalorder %s17, 1
      %s179 = scalar_select %p178, %s17, 1
      %p180 = scmp.lt.s32.totalorder %s177, 15
      %s181 = scalar_select %p180, %s177, 15
      %s182 = smul.addr %s181, 2
      %s183 = smul.addr %s179, 32
      %s184 = sadd.s32 %s182, %s183
      %s185 = smul.addr %s184, 8
      %s186 = scalar_lea.vmem %s2, %s185
      %s187 = smul.u32 8, %s18
      %v188 = vld [vmem:[%s1] sm:$0x1]
      %v189 = vld [vmem:[%s1 + $0x1] sm:$0x1]
      %v190 = vld [vmem:[%s175] sm:$0xff]
      %v191 = vld [vmem:[%s175 + $0x8] sm:$0xff]
      %v192 = vld [vmem:[%s175 + $0x10] sm:$0xff]
      %v193 = vld [vmem:[%s175 + $0x18] sm:$0xff]
      %v194 = vld [vmem:[%s175 + $0x20] sm:$0xff]
      %v195 = vld [vmem:[%s175 + $0x28] sm:$0xff]
      %v196 = vld [vmem:[%s175 + $0x30] sm:$0xff]
      %v197 = vld [vmem:[%s175 + $0x38] sm:$0xff]
      %v198 = vld [vmem:[%s175 + $0x40] sm:$0xff]
      %v199 = vld [vmem:[%s175 + $0x48] sm:$0xff]
      %v200 = vld [vmem:[%s175 + $0x50] sm:$0xff]
      %v201 = vld [vmem:[%s175 + $0x58] sm:$0xff]
      %v202 = vld [vmem:[%s175 + $0x60] sm:$0xff]
      %v203 = vld [vmem:[%s175 + $0x68] sm:$0xff]
      %v204 = vld [vmem:[%s175 + $0x70] sm:$0xff]
      %v205 = vld [vmem:[%s175 + $0x78] sm:$0xff]
      %v206 = vlaneseq
      %v207 = vshrl.u32 %v206, 7
      %v208 = vsub.s32 0, %v207
      %v209 = vrot.slane %v188, %v208
      %v210 = vmul.f32 %v190, %v209
      %v211 = vmul.f32 %v191, %v209
      %v212 = vmul.f32 %v192, %v209
      %v213 = vmul.f32 %v193, %v209
      %v214 = vmul.f32 %v194, %v209
      %v215 = vmul.f32 %v195, %v209
      %v216 = vmul.f32 %v196, %v209
      %v217 = vmul.f32 %v197, %v209
      %v218 = vmul.f32 %v198, %v209
      %v219 = vmul.f32 %v199, %v209
      %v220 = vmul.f32 %v200, %v209
      %v221 = vmul.f32 %v201, %v209
      %v222 = vmul.f32 %v202, %v209
      %v223 = vmul.f32 %v203, %v209
      %v224 = vmul.f32 %v204, %v209
      %v225 = vmul.f32 %v205, %v209
      %v226 = vlaneseq
      %v227 = vshrl.u32 %v226, 7
      %v228 = vsub.s32 0, %v227
      %v229 = vrot.slane %v189, %v228
      %v230 = vadd.f32 %v210, %v229
      %v231 = vadd.f32 %v211, %v229
      %v232 = vadd.f32 %v212, %v229
      %v233 = vadd.f32 %v213, %v229
      %v234 = vadd.f32 %v214, %v229
      %v235 = vadd.f32 %v215, %v229
      %v236 = vadd.f32 %v216, %v229
      %v237 = vadd.f32 %v217, %v229
      %v238 = vadd.f32 %v218, %v229
      %v239 = vadd.f32 %v219, %v229
      %v240 = vadd.f32 %v220, %v229
      %v241 = vadd.f32 %v221, %v229
      %v242 = vadd.f32 %v222, %v229
      %v243 = vadd.f32 %v223, %v229
      %v244 = vadd.f32 %v224, %v229
      %v245 = vadd.f32 %v225, %v229
      %v246 = vmax.f32 %v230, 0.0
      %v247 = vmax.f32 %v231, 0.0
      %v248 = vmax.f32 %v232, 0.0
      %v249 = vmax.f32 %v233, 0.0
      %v250 = vmax.f32 %v234, 0.0
      %v251 = vmax.f32 %v235, 0.0
      %v252 = vmax.f32 %v236, 0.0
      %v253 = vmax.f32 %v237, 0.0
      %v254 = vmax.f32 %v238, 0.0
      %v255 = vmax.f32 %v239, 0.0
      %v256 = vmax.f32 %v240, 0.0
      %v257 = vmax.f32 %v241, 0.0
      %v258 = vmax.f32 %v242, 0.0
      %v259 = vmax.f32 %v243, 0.0
      %v260 = vmax.f32 %v244, 0.0
      %v261 = vmax.f32 %v245, 0.0
      %vm262 = vcmask 64512
      %263 = vst.msk [vmem:[%s186] sm:$0xff] %vm262, %v246
      %264 = vst.msk [vmem:[%s186 + $0x8] sm:$0xff] %vm262, %v247
      %265 = vst.msk [vmem:[%s186 + $0x10] sm:$0xff] %vm262, %v248
      %266 = vst.msk [vmem:[%s186 + $0x18] sm:$0xff] %vm262, %v249
      %267 = vst.msk [vmem:[%s186 + $0x20] sm:$0xff] %vm262, %v250
      %268 = vst.msk [vmem:[%s186 + $0x28] sm:$0xff] %vm262, %v251
      %269 = vst.msk [vmem:[%s186 + $0x30] sm:$0xff] %vm262, %v252
      %270 = vst.msk [vmem:[%s186 + $0x38] sm:$0xff] %vm262, %v253
      %271 = vst.msk [vmem:[%s186 + $0x40] sm:$0xff] %vm262, %v254
      %272 = vst.msk [vmem:[%s186 + $0x48] sm:$0xff] %vm262, %v255
      %273 = vst.msk [vmem:[%s186 + $0x50] sm:$0xff] %vm262, %v256
      %274 = vst.msk [vmem:[%s186 + $0x58] sm:$0xff] %vm262, %v257
      %275 = vst.msk [vmem:[%s186 + $0x60] sm:$0xff] %vm262, %v258
      %276 = vst.msk [vmem:[%s186 + $0x68] sm:$0xff] %vm262, %v259
      %277 = vst.msk [vmem:[%s186 + $0x70] sm:$0xff] %vm262, %v260
      %278 = vst.msk [vmem:[%s186 + $0x78] sm:$0xff] %vm262, %v261
      %s279 = smul.u32 8, %s18
      %p280 = scmp.lt.s32.totalorder %s17, 1
      %s281 = scalar_select %p280, %s17, 1
      %p282 = scmp.lt.s32.totalorder %s279, 15
      %s283 = scalar_select %p282, %s279, 15
      %s284 = smul.addr %s283, 2
      %s285 = smul.addr %s281, 32
      %s286 = sadd.s32 %s284, %s285
      %s287 = smul.addr %s286, 8
      %s288 = scalar_lea.vmem %s2, %s287
      // Predicated region
      $region29: #{mobilenet_block.5} parent=27 // pred_check
        %p289 = pneg %p94
      $region30: #{mobilenet_block.5} parent=27 // pred_check_branch
        %291 = sbr.rel (%p289) target = $region32
      $region31: #{mobilenet_block.5} parent=27 // pred_region
        %s292 = smul.u32 8, %s18
      $region32: #{mobilenet_block.5} parent=27 // pred_fallthru
        _
    $region28: #{mobilenet_block.5} parent=5 // pred_fallthru
      _
    %p293 = scmp.le.s32.totalorder 2, %s8
    // Predicated region
    $region33: #{mobilenet_block.5} parent=5 // pred_check
      %p294 = pneg %p293
    $region34: #{mobilenet_block.5} parent=5 // pred_check_branch
      %296 = sbr.rel (%p294) target = $region36
    $region35: #{mobilenet_block.5} parent=5 // pred_region
      %s297 = ssub.s32 %s8, 2
      // Predicated region
      $region37: #{mobilenet_block.5} parent=35 // pred_check
        %p298 = pneg %p100
      $region38: #{mobilenet_block.5} parent=35 // pred_check_branch
        %300 = sbr.rel (%p298) target = $region40
      $region39: #{mobilenet_block.5} parent=35 // pred_region
        %s301 = smul.u32 8, %s20
        %p302 = scmp.lt.s32.totalorder %s19, 1
        %s303 = scalar_select %p302, %s19, 1
        %p304 = scmp.lt.s32.totalorder %s301, 15
        %s305 = scalar_select %p304, %s301, 15
        %s306 = smul.addr %s305, 2
        %s307 = smul.addr %s303, 32
        %s308 = sadd.s32 %s306, %s307
        %s309 = smul.addr %s308, 8
        %s310 = scalar_lea.vmem %s2, %s309
      $region40: #{mobilenet_block.5} parent=35 // pred_fallthru
        _
    $region36: #{mobilenet_block.5} parent=5 // pred_fallthru
      _
  $region6: #{mobilenet_block.5} parent=0 // loop_footer
    %s12 = sadd.s32 1, %s8
  $region7: #{mobilenet_block.5} parent=0 // loop_footer_branch
    %7 = sbr.rel target = $region3
  $region8: #{mobilenet_block.5} parent=0 // loop_exit
    _

// kernel: mobilenet_block.3
$region0: #{mobilenet_block.3}
  #allocation0 [shape = 'u32[]', space=smem, size = 0x4, offset = 0x4, fixed_abs, tag = 'smem constant byte address 0x4 - core index']
  #allocation1 [shape = 'u32[144,128]{1,0:T(1,128)}', space=vmem, size = 0x12000, scoped, tag = 'internal scratch']
  %s0 = inlined_call_operand.vmem [shape: f32[2,18,18,4], index: 0, kind: input, shape index: {}]
  %s1 = inlined_call_operand.vmem [shape: f32[9,4], index: 1, kind: input, shape index: {}]
  %s2 = inlined_call_operand.vmem [shape: f32[2,16,16,4], index: 2, kind: output, shape index: {0}]
  %s3 = inlined_call_operand.vmem [shape: f32[2,2,4], index: 3, kind: output, shape index: {1}]
  %4 = xla_tuple %s2, %s3
  %s5 = sld [smem:[#allocation0]]
  $region49: #{mobilenet_block.3} parent=0
    _
  %s7 = ssub.s32 1, %s5
  %s8 = scalar_select 0, %s7, %s5
  loop: start=0, step=1, limit=4
  $region2: #{mobilenet_block.3} parent=0 // loop_pre_header
    _
  $region3: #{mobilenet_block.3} parent=0 // loop_header
    %s10 = sphi 0, %s14
    %p11 = scmp.ge.s32.totalorder %s10, 4
    %s20 = sphi 0, %s22
    %s23 = sphi 0, %s20
    %s24 = sphi 0, %s23
    %s40 = sphi 0, %s24
    %s44 = sphi 0, %s44
    %s46 = sphi 0, %s44
    %s47 = sphi 0, %s46
    %s61 = sphi 0, %s47
    %s67 = sphi 0, %s69
    %s70 = sphi 0, %s67
    %s71 = sphi 0, %s70
    %s87 = sphi 0, %s71
    %s93 = sphi 0, %s95
    %s96 = sphi 0, %s93
    %s97 = sphi 0, %s96
    %s113 = sphi 0, %s97
  $region4: #{mobilenet_block.3} parent=0 // loop_header_branch
    %13 = sbr.rel (%p11) target = $region8
  $region5: #{mobilenet_block.3} parent=0 // loop_body
    %s15 = ssub.s32 %s10, 1
    %s16 = ssub.s32 %s10, 2
    %s17 = sadd.s32 %s10, 1
    %s18 = ssub.s32 %s10, %s17
    %p19 = scmp.eq.s32.totalorder %s18, 0
    %s21 = sadd.s32 %s20, 1
    %s22 = scalar_select %p19, %s20, %s21
    %p25 = pneg %p19
    %p26 = scmp.eq.s32.totalorder %s10, 1
    %p27 = por %p25, %p26
    %p28 = scmp.ne.s32.totalorder %s20, %s23
    %p29 = scmp.eq.s32.totalorder %s10, 0
    %p30 = por %p28, %p29
    %p31 = scmp.ne.s32.totalorder %s20, %s23
    %p32 = scmp.eq.s32.totalorder %s15, 1
    %p33 = por %p31, %p32
    %p34 = scmp.ne.s32.totalorder %s23, %s24
    %p35 = scmp.eq.s32.totalorder %s15, 0
    %p36 = por %p34, %p35
    %p37 = scmp.ne.s32.totalorder %s23, %s24
    %p38 = scmp.eq.s32.totalorder %s16, 1
    %p39 = por %p37, %p38
    %p41 = scmp.ne.s32.totalorder %s24, %s40
    %p42 = scmp.eq.s32.totalorder %s16, 0
    %p43 = por %p41, %p42
    %s45 = sadd.s32 %s44, 1
    %p48 = scmp.eq.s32.totalorder %s10, 1
    %p49 = scmp.ne.s32.totalorder %s44, %s46
    %p50 = scmp.eq.s32.totalorder %s10, 0
    %p51 = por %p49, %p50
    %p52 = scmp.ne.s32.totalorder %s44, %s46
    %p53 = scmp.eq.s32.totalorder %s15, 1
    %p54 = por %p52, %p53
    %p55 = scmp.ne.s32.totalorder %s46, %s47
    %p56 = scmp.eq.s32.totalorder %s15, 0
    %p57 = por %p55, %p56
    %p58 = scmp.ne.s32.totalorder %s46, %s47
    %p59 = scmp.eq.s32.totalorder %s16, 1
    %p60 = por %p58, %p59
    %p62 = scmp.ne.s32.totalorder %s47, %s61
    %p63 = scmp.eq.s32.totalorder %s16, 0
    %p64 = por %p62, %p63
    %s65 = ssub.s32 %s10, %s17
    %p66 = scmp.eq.s32.totalorder %s65, 0
    %s68 = sadd.s32 %s67, 1
    %s69 = scalar_select %p66, %s67, %s68
    %p72 = pneg %p66
    %p73 = scmp.eq.s32.totalorder %s10, 1
    %p74 = por %p72, %p73
    %p75 = scmp.ne.s32.totalorder %s67, %s70
    %p76 = scmp.eq.s32.totalorder %s10, 0
    %p77 = por %p75, %p76
    %p78 = scmp.ne.s32.totalorder %s67, %s70
    %p79 = scmp.eq.s32.totalorder %s15, 1
    %p80 = por %p78, %p79
    %p81 = scmp.ne.s32.totalorder %s70, %s71
    %p82 = scmp.eq.s32.totalorder %s15, 0
    %p83 = por %p81, %p82
    %p84 = scmp.ne.s32.totalorder %s70, %s71
    %p85 = scmp.eq.s32.totalorder %s16, 1
    %p86 = por %p84, %p85
    %p88 = scmp.ne.s32.totalorder %s71, %s87
    %p89 = scmp.eq.s32.totalorder %s16, 0
    %p90 = por %p88, %p89
    %s91 = ssub.s32 %s10, %s17
    %p92 = scmp.eq.s32.totalorder %s91, 0
    %s94 = sadd.s32 %s93, 1
    %s95 = scalar_select %p92, %s93, %s94
    %p98 = pneg %p92
    %p99 = scmp.eq.s32.totalorder %s10, 1
    %p100 = por %p98, %p99
    %p101 = scmp.ne.s32.totalorder %s93, %s96
    %p102 = scmp.eq.s32.totalorder %s10, 0
    %p103 = por %p101, %p102
    %p104 = scmp.ne.s32.totalorder %s93, %s96
    %p105 = scmp.eq.s32.totalorder %s15, 1
    %p106 = por %p104, %p105
    %p107 = scmp.ne.s32.totalorder %s96, %s97
    %p108 = scmp.eq.s32.totalorder %s15, 0
    %p109 = por %p107, %p108
    %p110 = scmp.ne.s32.totalorder %s96, %s97
    %p111 = scmp.eq.s32.totalorder %s16, 1
    %p112 = por %p110, %p111
    %p114 = scmp.ne.s32.totalorder %s97, %s113
    %p115 = scmp.eq.s32.totalorder %s16, 0
    %p116 = por %p114, %p115
    %p117 = scmp.le.s32.totalorder 1, %s10
    %p118 = scmp.lt.s32.totalorder %s10, 3
    %p119 = pnand %p117, %p118
    %p120 = pneg %p119
    // Predicated region
    $region9: #{mobilenet_block.3} parent=5 // pred_check
      _
    $region10: #{mobilenet_block.3} parent=5 // pred_check_branch
      %122 = sbr.rel (%p119) target = $region12
    $region11: #{mobilenet_block.3} parent=5 // pred_region
      %s123 = ssub.s32 %s10, 1
      // Predicated region
      $region13: #{mobilenet_block.3} parent=11 // pred_check
        %p124 = pneg %p57
      $region14: #{mobilenet_block.3} parent=11 // pred_check_branch
        %126 = sbr.rel (%p124) target = $region16
      $region15: #{mobilenet_block.3} parent=11 // pred_region
        _
      $region16: #{mobilenet_block.3} parent=11 // pred_fallthru
        _
    $region12: #{mobilenet_block.3} parent=5 // pred_fallthru
      _
    %p127 = scmp.lt.s32.totalorder %s10, 2
    // Predicated region
    $region17: #{mobilenet_block.3} parent=5 // pred_check
      %p128 = pneg %p127
    $region18: #{mobilenet_block.3} parent=5 // pred_check_branch
      %130 = sbr.rel (%p128) target = $region20
    $region19: #{mobilenet_block.3} parent=5 // pred_region
      // Predicated region
      $region21: #{mobilenet_block.3} parent=19 // pred_check
        %p131 = pneg %p30
      $region22: #{mobilenet_block.3} parent=19 // pred_check_branch
        %133 = sbr.rel (%p131) target = $region24
      $region23: #{mobilenet_block.3} parent=19 // pred_region
        %p134 = scmp.lt.s32.totalorder %s10, 1
        %s135 = scalar_select %p134, %s10, 1
        %s136 = smul.addr %s135, 54
        %s137 = smul.addr %s136, 8
        %s138 = scalar_lea.vmem %s0, %s137
      $region24: #{mobilenet_block.3} parent=19 // pred_fallthru
        _
    $region20: #{mobilenet_block.3} parent=5 // pred_fallthru
      _
    %p139 = scmp.le.s32.totalorder 1, %s10
    %p140 = scmp.lt.s32.totalorder %s10, 3
    %p141 = pnand %p139, %p140
    %p142 = pneg %p141
    // Predicated region
    $region25: #{mobilenet_block.3} parent=5 // pred_check
      _
    $region26: #{mobilenet_block.3} parent=5 // pred_check_branch
      %144 = sbr.rel (%p141) target = $region28
    $region27: #{mobilenet_block.3} parent=5 // pred_region
      %s145 = ssub.s32 %s10, 1
      %p146 = scmp.lt.s32.totalorder %s15, 1
      %s147 = scalar_select %p146, %s15, 1
      %s148 = smul.addr %s147, 54
      %s149 = smul.addr %s148, 8
      %s150 = scalar_lea.vmem %s0, %s149
      %p151 = pneg %p36
      %p152 = pneg %p33
      %p153 = pneg %p57
      %p154 = pneg %p54
      %p155 = pneg %p83
      %p156 = pneg %p80
      %p157 = scmp.lt.s32.totalorder %s15, 1
      %s158 = scalar_select %p157, %s15, 1
      %s159 = smul.addr %s158, 32
      %s160 = smul.addr %s159, 8
      %s161 = scalar_lea.vmem %s2, %s160
      %p162 = pneg %p109
      %p163 = pneg %p106
      %p164 = scmp.lt.s32.totalorder %s15, 1
      %s165 = scalar_select %p164, %s15, 1
      %s166 = smul.addr %s165, 2
      %s167 = scalar_lea.vmem %s3, %s166
      %p168 = scmp.lt.s32.totalorder %s15, 1
      %s169 = scalar_select %p168, %s15, 1
      %s170 = smul.addr %s169, 54
      %s171 = smul.addr %s170, 8
      %s172 = scalar_lea.vmem %s0, %s171
      %p173 = scmp.lt.s32.totalorder %s15, 1
      %s174 = scalar_select %p173, %s15, 1
      %s175 = smul.addr %s174, 32
      %s176 = smul.addr %s175, 8
      %s177 = scalar_lea.vmem %s2, %s176
      %p178 = scmp.lt.s32.totalorder %s15, 1
      %s179 = scalar_select %p178, %s15, 1
      %s180 = smul.addr %s179, 2
      %s181 = scalar_lea.vmem %s3, %s180
      %v182 = vld [vmem:[%s1] sm:$0x1]
      %v183 = vld [vmem:[%s172] sm:$0xff]
      %v184 = vld [vmem:[%s172 + $0x8] sm:$0xff]
      %v185 = vld [vmem:[%s172 + $0x18] sm:$0xff]
      %v186 = vld [vmem:[%s172 + $0x20] sm:$0xff]
      %v187 = vld [vmem:[%s172 + $0x30] sm:$0xff]
      %v188 = vld [vmem:[%s172 + $0x38] sm:$0xff]
      %v189 = vld [vmem:[%s172 + $0x48] sm:$0xff]
      %v190 = vld [vmem:[%s172 + $0x50] sm:$0xff]
      %v191 = vld [vmem:[%s172 + $0x60] sm:$0xff]
      %v192 = vld [vmem:[%s172 + $0x68] sm:$0xff]
      %v193 = vld [vmem:[%s172 + $0x78] sm:$0xff]
      %v194 = vld [vmem:[%s172 + $0x80] sm:$0xff]
      %v195 = vld [vmem:[%s172 + $0x90] sm:$0xff]
      %v196 = vld [vmem:[%s172 + $0x98] sm:$0xff]
      %v197 = vld [vmem:[%s172 + $0xa8] sm:$0xff]
      %v198 = vld [vmem:[%s172 + $0xb0] sm:$0xff]
      %v199 = vld [vmem:[%s172 + $0xc0] sm:$0xff]
      %v200 = vld [vmem:[%s172 + $0xc8] sm:$0xff]
      %v201 = vld [vmem:[%s172 + $0xd8] sm:$0xff]
      %v202 = vld [vmem:[%s172 + $0xe0] sm:$0xff]
      %v203 = vld [vmem:[%s172 + $0xf0] sm:$0xff]
      %v204 = vld [vmem:[%s172 + $0xf8] sm:$0xff]
      %v205 = vld [vmem:[%s172 + $0x108] sm:$0xff]
      %v206 = vld [vmem:[%s172 + $0x110] sm:$0xff]
      %v207 = vld [vmem:[%s172 + $0x120] sm:$0xff]
      %v208 = vld [vmem:[%s172 + $0x128] sm:$0xff]
      %v209 = vld [vmem:[%s172 + $0x138] sm:$0xff]
      %v210 = vld [vmem:[%s172 + $0x140] sm:$0xff]
      %v211 = vld [vmem:[%s172 + $0x150] sm:$0xff]
      %v212 = vld [vmem:[%s172 + $0x158] sm:$0xff]
      %v213 = vld [vmem:[%s172 + $0x168] sm:$0xff]
      %v214 = vld [vmem:[%s172 + $0x170] sm:$0xff]
      %v215 = vlaneseq
      %v216 = vshrl.u32 %v215, 7
      %v217 = vsub.s32 0, %v216
      %v218 = vrot.slane %v182, %v217
      %v219 = vmul.f32 %v183, %v218
      %v220 = vmul.f32 %v184, %v218
      %v221 = vmul.f32 %v185, %v218
      %v222 = vmul.f32 %v186, %v218
      %v223 = vmul.f32 %v187, %v218
      %v224 = vmul.f32 %v188, %v218
      %v225 = vmul.f32 %v189, %v218
      %v226 = vmul.f32 %v190, %v218
      %v227 = vmul.f32 %v191, %v218
      %v228 = vmul.f32 %v192, %v218
      %v229 = vmul.f32 %v193, %v218
      %v230 = vmul.f32 %v194, %v218
      %v231 = vmul.f32 %v195, %v218
      %v232 = vmul.f32 %v196, %v218
      %v233 = vmul.f32 %v197, %v218
      %v234 = vmul.f32 %v198, %v218
      %v235 = vmul.f32 %v199, %v218
      %v236 = vmul.f32 %v200, %v218
      %v237 = vmul.f32 %v201, %v218
      %v238 = vmul.f32 %v202, %v218
      %v239 = vmul.f32 %v203, %v218
      %v240 = vmul.f32 %v204, %v218
      %v241 = vmul.f32 %v205, %v218
      %v242 = vmul.f32 %v206, %v218
      %v243 = vmul.f32 %v207, %v218
      %v244 = vmul.f32 %v208, %v218
      %v245 = vmul.f32 %v209, %v218
      %v246 = vmul.f32 %v210, %v218
      %v247 = vmul.f32 %v211, %v218
      %v248 = vmul.f32 %v212, %v218
      %v249 = vmul.f32 %v213, %v218
      %v250 = vmul.f32 %v214, %v218
      %v251 = vadd.f32 %v219, 0.0
      %v252 = vadd.f32 %v220, 0.0
      %v253 = vadd.f32 %v221, 0.0
      %v254 = vadd.f32 %v222, 0.0
      %v255 = vadd.f32 %v223, 0.0
      %v256 = vadd.f32 %v224, 0.0
      %v257 = vadd.f32 %v225, 0.0
      %v258 = vadd.f32 %v226, 0.0
      %v259 = vadd.f32 %v227, 0.0
      %v260 = vadd.f32 %v228, 0.0
      %v261 = vadd.f32 %v229, 0.0
      %v262 = vadd.f32 %v230, 0.0
      %v263 = vadd.f32 %v231, 0.0
      %v264 = vadd.f32 %v232, 0.0
      %v265 = vadd.f32 %v233, 0.0
      %v266 = vadd.f32 %v234, 0.0
      %v267 = vadd.f32 %v235, 0.0
      %v268 = vadd.f32 %v236, 0.0
      %v269 = vadd.f32 %v237, 0.0
      %v270 = vadd.f32 %v238, 0.0
      %v271 = vadd.f32 %v239, 0.0
      %v272 = vadd.f32 %v240, 0.0
      %v273 = vadd.f32 %v241, 0.0
      %v274 = vadd.f32 %v242, 0.0
      %v275 = vadd.f32 %v243, 0.0
      %v276 = vadd.f32 %v244, 0.0
      %v277 = vadd.f32 %v245, 0.0
      %v278 = vadd.f32 %v246, 0.0
      %v279 = vadd.f32 %v247, 0.0
      %v280 = vadd.f32 %v248, 0.0
      %v281 = vadd.f32 %v249, 0.0
      %v282 = vadd.f32 %v250, 0.0
      %v283 = vld [vmem:[%s1 + $0x1] sm:$0x1]
      %v284 = vld [vmem:[%s172 + $0x1] sm:$0xff]
      %v285 = vld [vmem:[%s172 + $0x9] sm:$0xff]
      %v286 = vld [vmem:[%s172 + $0x19] sm:$0xff]
      %v287 = vld [vmem:[%s172 + $0x21] sm:$0xff]
      %v288 = vld [vmem:[%s172 + $0x31] sm:$0xff]
      %v289 = vld [vmem:[%s172 + $0x39] sm:$0xff]
      %v290 = vld [vmem:[%s172 + $0x49] sm:$0xff]
      %v291 = vld [vmem:[%s172 + $0x51] sm:$0xff]
      %v292 = vld [vmem:[%s172 + $0x61] sm:$0xff]
      %v293 = vld [vmem:[%s172 + $0x69] sm:$0xff]
      %v294 = vld [vmem:[%s172 + $0x79] sm:$0xff]
      %v295 = vld [vmem:[%s172 + $0x81] sm:$0xff]
      %v296 = vld [vmem:[%s172 + $0x91] sm:$0xff]
      %v297 = vld [vmem:[%s172 + $0x99] sm:$0xff]
      %v298 = vld [vmem:[%s172 + $0xa9] sm:$0xff]
      %v299 = vld [vmem:[%s172 + $0xb1] sm:$0xff]
      %v300 = vld [vmem:[%s172 + $0xc1] sm:$0xff]
      %v301 = vld [vmem:[%s172 + $0xc9] sm:$0xff]
      %v302 = vld [vmem:[%s172 + $0xd9] sm:$0xff]
      %v303 = vld [vmem:[%s172 + $0xe1] sm:$0xff]
      %v304 = vld [vmem:[%s172 + $0xf1] sm:$0xff]
      %v305 = vld [vmem:[%s172 + $0xf9] sm:$0xff]
      %v306 = vld [vmem:[%s172 + $0x109] sm:$0xff]
      %v307 = vld [vmem:[%s172 + $0x111] sm:$0xff]
      %v308 = vld [vmem:[%s172 + $0x121] sm:$0xff]
      %v309 = vld [vmem:[%s172 + $0x129] sm:$0xff]
      %v310 = vld [vmem:[%s172 + $0x139] sm:$0xff]
      %v311 = vld [vmem:[%s172 + $0x141] sm:$0xff]
      %v312 = vld [vmem:[%s172 + $0x151] sm:$0xff]
      %v313 = vld [vmem:[%s172 + $0x159] sm:$0xff]
      %v314 = vld [vmem:[%s172 + $0x169] sm:$0xff]
      %v315 = vld [vmem:[%s172 + $0x171] sm:$0xff]
      %v316 = vlaneseq
      %v317 = vshrl.u32 %v316, 7
      %v318 = vsub.s32 0, %v317
      %v319 = vrot.slane %v283, %v318
      %v320 = vmul.f32 %v284, %v319
      %v321 = vmul.f32 %v285, %v319
      %v322 = vmul.f32 %v286, %v319
      %v323 = vmul.f32 %v287, %v319
      %v324 = vmul.f32 %v288, %v319
      %v325 = vmul.f32 %v289, %v319
      %v326 = vmul.f32 %v290, %v319
      %v327 = vmul.f32 %v291, %v319
      %v328 = vmul.f32 %v292, %v319
      %v329 = vmul.f32 %v293, %v319
      %v330 = vmul.f32 %v294, %v319
      %v331 = vmul.f32 %v295, %v319
      %v332 = vmul.f32 %v296, %v319
      %v333 = vmul.f32 %v297, %v319
      %v334 = vmul.f32 %v298, %v319
      %v335 = vmul.f32 %v299, %v319
      %v336 = vmul.f32 %v300, %v319
      %v337 = vmul.f32 %v301, %v319
      %v338 = vmul.f32 %v302, %v319
      %v339 = vmul.f32 %v303, %v319
      %v340 = vmul.f32 %v304, %v319
      %v341 = vmul.f32 %v305, %v319
      %v342 = vmul.f32 %v306, %v319
      %v343 = vmul.f32 %v307, %v319
      %v344 = vmul.f32 %v308, %v319
      %v345 = vmul.f32 %v309, %v319
      %v346 = vmul.f32 %v310, %v319
      %v347 = vmul.f32 %v311, %v319
      %v348 = vmul.f32 %v312, %v319
      %v349 = vmul.f32 %v313, %v319
      %v350 = vmul.f32 %v314, %v319
      %v351 = vmul.f32 %v315, %v319
      %v352 = vadd.f32 %v251, %v320
      %v353 = vadd.f32 %v252, %v321
      %v354 = vadd.f32 %v253, %v322
      %v355 = vadd.f32 %v254, %v323
      %v356 = vadd.f32 %v255, %v324
      %v357 = vadd.f32 %v256, %v325
      %v358 = vadd.f32 %v257, %v326
      %v359 = vadd.f32 %v258, %v327
      %v360 = vadd.f32 %v259, %v328
      %v361 = vadd.f32 %v260, %v329
      %v362 = vadd.f32 %v261, %v330
      %v363 = vadd.f32 %v262, %v331
      %v364 = vadd.f32 %v263, %v332
      %v365 = vadd.f32 %v264, %v333
      %v366 = vadd.f32 %v265, %v334
      %v367 = vadd.f32 %v266, %v335
      %v368 = vadd.f32 %v267, %v336
      %v369 = vadd.f32 %v268, %v337
      %v370 = vadd.f32 %v269, %v338
      %v371 = vadd.f32 %v270, %v339
      %v372 = vadd.f32 %v271, %v340
      %v373 = vadd.f32 %v272, %v341
      %v374 = vadd.f32 %v273, %v342
      %v375 = vadd.f32 %v274, %v343
      %v376 = vadd.f32 %v275, %v344
      %v377 = vadd.f32 %v276, %v345
      %v378 = vadd.f32 %v277, %v346
      %v379 = vadd.f32 %v278, %v347
      %v380 = vadd.f32 %v279, %v348
      %v381 = vadd.f32 %v280, %v349
      %v382 = vadd.f32 %v281, %v350
      %v383 = vadd.f32 %v282, %v351
      %v384 = vld [vmem:[%s1 + $0x2] sm:$0x1]
      %v385 = vld [vmem:[%s172 + $0x2] sm:$0xff]
      %v386 = vld [vmem:[%s172 + $0xa] sm:$0xff]
      %v387 = vld [vmem:[%s172 + $0x1a] sm:$0xff]
      %v388 = vld [vmem:[%s172 + $0x22] sm:$0xff]
      %v389 = vld [vmem:[%s172 + $0x32] sm:$0xff]
      %v390 = vld [vmem:[%s172 + $0x3a] sm:$0xff]
      %v391 = vld [vmem:[%s172 + $0x4a] sm:$0xff]
      %v392 = vld [vmem:[%s172 + $0x52] sm:$0xff]
      %v393 = vld [vmem:[%s172 + $0x62] sm:$0xff]
      %v394 = vld [vmem:[%s172 + $0x6a] sm:$0xff]
      %v395 = vld [vmem:[%s172 + $0x7a] sm:$0xff]
      %v396 = vld [vmem:[%s172 + $0x82] sm:$0xff]
      %v397 = vld [vmem:[%s172 + $0x92] sm:$0xff]
      %v398 = vld [vmem:[%s172 + $0x9a] sm:$0xff]
      %v399 = vld [vmem:[%s172 + $0xaa] sm:$0xff]
      %v400 = vld [vmem:[%s172 + $0xb2] sm:$0xff]
      %v401 = vld [vmem:[%s172 + $0xc2] sm:$0xff]
      %v402 = vld [vmem:[%s172 + $0xca] sm:$0xff]
      %v403 = vld [vmem:[%s172 + $0xda] sm:$0xff]
      %v404 = vld [vmem:[%s172 + $0xe2] sm:$0xff]
      %v405 = vld [vmem:[%s172 + $0xf2] sm:$0xff]
      %v406 = vld [vmem:[%s172 + $0xfa] sm:$0xff]
      %v407 = vld [vmem:[%s172 + $0x10a] sm:$0xff]
      %v408 = vld [vmem:[%s172 + $0x112] sm:$0xff]
      %v409 = vld [vmem:[%s172 + $0x122] sm:$0xff]
      %v410 = vld [vmem:[%s172 + $0x12a] sm:$0xff]
      %v411 = vld [vmem:[%s172 + $0x13a] sm:$0xff]
      %v412 = vld [vmem:[%s172 + $0x142] sm:$0xff]
      %v413 = vld [vmem:[%s172 + $0x152] sm:$0xff]
      %v414 = vld [vmem:[%s172 + $0x15a] sm:$0xff]
      %v415 = vld [vmem:[%s172 + $0x16a] sm:$0xff]
      %v416 = vld [vmem:[%s172 + $0x172] sm:$0xff]
      %v417 = vlaneseq
      %v418 = vshrl.u32 %v417, 7
      %v419 = vsub.s32 0, %v418
      %v420 = vrot.slane %v384, %v419
      %v421 = vmul.f32 %v385, %v420
      %v422 = vmul.f32 %v386, %v420
      %v423 = vmul.f32 %v387, %v420
      %v424 = vmul.f32 %v388, %v420
      %v425 = vmul.f32 %v389, %v420
      %v426 = vmul.f32 %v390, %v420
      %v427 = vmul.f32 %v391, %v420
      %v428 = vmul.f32 %v392, %v420
      %v429 = vmul.f32 %v393, %v420
      %v430 = vmul.f32 %v394, %v420
      %v431 = vmul.f32 %v395, %v420
      %v432 = vmul.f32 %v396, %v420
      %v433 = vmul.f32 %v397, %v420
      %v434 = vmul.f32 %v398, %v420
      %v435 = vmul.f32 %v399, %v420
      %v436 = vmul.f32 %v400, %v420
      %v437 = vmul.f32 %v401, %v420
      %v438 = vmul.f32 %v402, %v420
      %v439 = vmul.f32 %v403, %v420
      %v440 = vmul.f32 %v404, %v420
      %v441 = vmul.f32 %v405, %v420
      %v442 = vmul.f32 %v406, %v420
      %v443 = vmul.f32 %v407, %v420
      %v444 = vmul.f32 %v408, %v420
      %v445 = vmul.f32 %v409, %v420
      %v446 = vmul.f32 %v410, %v420
      %v447 = vmul.f32 %v411, %v420
      %v448 = vmul.f32 %v412, %v420
      %v449 = vmul.f32 %v413, %v420
      %v450 = vmul.f32 %v414, %v420
      %v451 = vmul.f32 %v415, %v420
      %v452 = vmul.f32 %v416, %v420
      %v453 = vadd.f32 %v352, %v421
      %v454 = vadd.f32 %v353, %v422
      %v455 = vadd.f32 %v354, %v423
      %v456 = vadd.f32 %v355, %v424
      %v457 = vadd.f32 %v356, %v425
      %v458 = vadd.f32 %v357, %v426
      %v459 = vadd.f32 %v358, %v427
      %v460 = vadd.f32 %v359, %v428
      %v461 = vadd.f32 %v360, %v429
      %v462 = vadd.f32 %v361, %v430
      %v463 = vadd.f32 %v362, %v431
      %v464 = vadd.f32 %v363, %v432
      %v465 = vadd.f32 %v364, %v433
      %v466 = vadd.f32 %v365, %v434
      %v467 = vadd.f32 %v366, %v435
      %v468 = vadd.f32 %v367, %v436
      %v469 = vadd.f32 %v368, %v437
      %v470 = vadd.f32 %v369, %v438
      %v471 = vadd.f32 %v370, %v439
      %v472 = vadd.f32 %v371, %v440
      %v473 = vadd.f32 %v372, %v441
      %v474 = vadd.f32 %v373, %v442
      %v475 = vadd.f32 %v374, %v443
      %v476 = vadd.f32 %v375, %v444
      %v477 = vadd.f32 %v376, %v445
      %v478 = vadd.f32 %v377, %v446
      %v479 = vadd.f32 %v378, %v447
      %v480 = vadd.f32 %v379, %v448
      %v481 = vadd.f32 %v380, %v449
      %v482 = vadd.f32 %v381, %v450
      %v483 = vadd.f32 %v382, %v451
      %v484 = vadd.f32 %v383, %v452
      %v485 = vld [vmem:[%s1 + $0x3] sm:$0x1]
      %s486 = scalar_lea.vmem %s172, 24
      %v487 = vld [vmem:[%s486] sm:$0xff]
      %v488 = vld [vmem:[%s486 + $0x8] sm:$0xff]
      %v489 = vld [vmem:[%s486 + $0x18] sm:$0xff]
      %v490 = vld [vmem:[%s486 + $0x20] sm:$0xff]
      %v491 = vld [vmem:[%s486 + $0x30] sm:$0xff]
      %v492 = vld [vmem:[%s486 + $0x38] sm:$0xff]
      %v493 = vld [vmem:[%s486 + $0x48] sm:$0xff]
      %v494 = vld [vmem:[%s486 + $0x50] sm:$0xff]
      %v495 = vld [vmem:[%s486 + $0x60] sm:$0xff]
      %v496 = vld [vmem:[%s486 + $0x68] sm:$0xff]
      %v497 = vld [vmem:[%s486 + $0x78] sm:$0xff]
      %v498 = vld [vmem:[%s486 + $0x80] sm:$0xff]
      %v499 = vld [vmem:[%s486 + $0x90] sm:$0xff]
      %v500 = vld [vmem:[%s486 + $0x98] sm:$0xff]
      %v501 = vld [vmem:[%s486 + $0xa8] sm:$0xff]
      %v502 = vld [vmem:[%s486 + $0xb0] sm:$0xff]
      %v503 = vld [vmem:[%s486 + $0xc0] sm:$0xff]
      %v504 = vld [vmem:[%s486 + $0xc8] sm:$0xff]
      %v505 = vld [vmem:[%s486 + $0xd8] sm:$0xff]
      %v506 = vld [vmem:[%s486 + $0xe0] sm:$0xff]
      %v507 = vld [vmem:[%s486 + $0xf0] sm:$0xff]
      %v508 = vld [vmem:[%s486 + $0xf8] sm:$0xff]
      %v509 = vld [vmem:[%s486 + $0x108] sm:$0xff]
      %v510 = vld [vmem:[%s486 + $0x110] sm:$0xff]
      %v511 = vld [vmem:[%s486 + $0x120] sm:$0xff]
      %v512 = vld [vmem:[%s486 + $0x128] sm:$0xff]
      %v513 = vld [vmem:[%s486 + $0x138] sm:$0xff]
      %v514 = vld [vmem:[%s486 + $0x140] sm:$0xff]
      %v515 = vld [vmem:[%s486 + $0x150] sm:$0xff]
      %v516 = vld [vmem:[%s486 + $0x158] sm:$0xff]
      %v517 = vld [vmem:[%s486 + $0x168] sm:$0xff]
      %v518 = vld [vmem:[%s486 + $0x170] sm:$0xff]
      %v519 = vlaneseq
      %v520 = vshrl.u32 %v519, 7
      %v521 = vsub.s32 0, %v520
      %v522 = vrot.slane %v485, %v521
      %v523 = vmul.f32 %v487, %v522
      %v524 = vmul.f32 %v488, %v522
      %v525 = vmul.f32 %v489, %v522
      %v526 = vmul.f32 %v490, %v522
      %v527 = vmul.f32 %v491, %v522
      %v528 = vmul.f32 %v492, %v522
      %v529 = vmul.f32 %v493, %v522
      %v530 = vmul.f32 %v494, %v522
      %v531 = vmul.f32 %v495, %v522
      %v532 = vmul.f32 %v496, %v522
      %v533 = vmul.f32 %v497, %v522
      %v534 = vmul.f32 %v498, %v522
      %v535 = vmul.f32 %v499, %v522
      %v536 = vmul.f32 %v500, %v522
      %v537 = vmul.f32 %v501, %v522
      %v538 = vmul.f32 %v502, %v522
      %v539 = vmul.f32 %v503, %v522
      %v540 = vmul.f32 %v504, %v522
      %v541 = vmul.f32 %v505, %v522
      %v542 = vmul.f32 %v506, %v522
      %v543 = vmul.f32 %v507, %v522
      %v544 = vmul.f32 %v508, %v522
      %v545 = vmul.f32 %v509, %v522
      %v546 = vmul.f32 %v510, %v522
      %v547 = vmul.f32 %v511, %v522
      %v548 = vmul.f32 %v512, %v522
      %v549 = vmul.f32 %v513, %v522
      %v550 = vmul.f32 %v514, %v522
      %v551 = vmul.f32 %v515, %v522
      %v552 = vmul.f32 %v516, %v522
      %v553 = vmul.f32 %v517, %v522
      %v554 = vmul.f32 %v518, %v522
      %v555 = vadd.f32 %v453, %v523
      %v556 = vadd.f32 %v454, %v524
      %v557 = vadd.f32 %v455, %v525
      %v558 = vadd.f32 %v456, %v526
      %v559 = vadd.f32 %v457, %v527
      %v560 = vadd.f32 %v458, %v528
      %v561 = vadd.f32 %v459, %v529
      %v562 = vadd.f32 %v460, %v530
      %v563 = vadd.f32 %v461, %v531
      %v564 = vadd.f32 %v462, %v532
      %v565 = vadd.f32 %v463, %v533
      %v566 = vadd.f32 %v464, %v534
      %v567 = vadd.f32 %v465, %v535
      %v568 = vadd.f32 %v466, %v536
      %v569 = vadd.f32 %v467, %v537
      %v570 = vadd.f32 %v468, %v538
      %v571 = vadd.f32 %v469, %v539
      %v572 = vadd.f32 %v470, %v540
      %v573 = vadd.f32 %v471, %v541
      %v574 = vadd.f32 %v472, %v542
      %v575 = vadd.f32 %v473, %v543
      %v576 = vadd.f32 %v474, %v544
      %v577 = vadd.f32 %v475, %v545
      %v578 = vadd.f32 %v476, %v546
      %v579 = vadd.f32 %v477, %v547
      %v580 = vadd.f32 %v478, %v548
      %v581 = vadd.f32 %v479, %v549
      %v582 = vadd.f32 %v480, %v550
      %v583 = vadd.f32 %v481, %v551
      %v584 = vadd.f32 %v482, %v552
      %v585 = vadd.f32 %v483, %v553
      %v586 = vadd.f32 %v484, %v554
      %v587 = vld [vmem:[%s1 + $0x4] sm:$0x1]
      %v588 = vld [vmem:[%s486 + $0x1] sm:$0xff]
      %v589 = vld [vmem:[%s486 + $0x9] sm:$0xff]
      %v590 = vld [vmem:[%s486 + $0x19] sm:$0xff]
      %v591 = vld [vmem:[%s486 + $0x21] sm:$0xff]
      %v592 = vld [vmem:[%s486 + $0x31] sm:$0xff]
      %v593 = vld [vmem:[%s486 + $0x39] sm:$0xff]
      %v594 = vld [vmem:[%s486 + $0x49] sm:$0xff]
      %v595 = vld [vmem:[%s486 + $0x51] sm:$0xff]
      %v596 = vld [vmem:[%s486 + $0x61] sm:$0xff]
      %v597 = vld [vmem:[%s486 + $0x69] sm:$0xff]
      %v598 = vld [vmem:[%s486 + $0x79] sm:$0xff]
      %v599 = vld [vmem:[%s486 + $0x81] sm:$0xff]
      %v600 = vld [vmem:[%s486 + $0x91] sm:$0xff]
      %v601 = vld [vmem:[%s486 + $0x99] sm:$0xff]
      %v602 = vld [vmem:[%s486 + $0xa9] sm:$0xff]
      %v603 = vld [vmem:[%s486 + $0xb1] sm:$0xff]
      %v604 = vld [vmem:[%s486 + $0xc1] sm:$0xff]
      %v605 = vld [vmem:[%s486 + $0xc9] sm:$0xff]
      %v606 = vld [vmem:[%s486 + $0xd9] sm:$0xff]
      %v607 = vld [vmem:[%s486 + $0xe1] sm:$0xff]
      %v608 = vld [vmem:[%s486 + $0xf1] sm:$0xff]
      %v609 = vld [vmem:[%s486 + $0xf9] sm:$0xff]
      %v610 = vld [vmem:[%s486 + $0x109] sm:$0xff]
      %v611 = vld [vmem:[%s486 + $0x111] sm:$0xff]
      %v612 = vld [vmem:[%s486 + $0x121] sm:$0xff]
      %v613 = vld [vmem:[%s486 + $0x129] sm:$0xff]
      %v614 = vld [vmem:[%s486 + $0x139] sm:$0xff]
      %v615 = vld [vmem:[%s486 + $0x141] sm:$0xff]
      %v616 = vld [vmem:[%s486 + $0x151] sm:$0xff]
      %v617 = vld [vmem:[%s486 + $0x159] sm:$0xff]
      %v618 = vld [vmem:[%s486 + $0x169] sm:$0xff]
      %v619 = vld [vmem:[%s486 + $0x171] sm:$0xff]
      %v620 = vlaneseq
      %v621 = vshrl.u32 %v620, 7
      %v622 = vsub.s32 0, %v621
      %v623 = vrot.slane %v587, %v622
      %v624 = vmul.f32 %v588, %v623
      %v625 = vmul.f32 %v589, %v623
      %v626 = vmul.f32 %v590, %v623
      %v627 = vmul.f32 %v591, %v623
      %v628 = vmul.f32 %v592, %v623
      %v629 = vmul.f32 %v593, %v623
      %v630 = vmul.f32 %v594, %v623
      %v631 = vmul.f32 %v595, %v623
      %v632 = vmul.f32 %v596, %v623
      %v633 = vmul.f32 %v597, %v623
      %v634 = vmul.f32 %v598, %v623
      %v635 = vmul.f32 %v599, %v623
      %v636 = vmul.f32 %v600, %v623
      %v637 = vmul.f32 %v601, %v623
      %v638 = vmul.f32 %v602, %v623
      %v639 = vmul.f32 %v603, %v623
      %v640 = vmul.f32 %v604, %v623
      %v641 = vmul.f32 %v605, %v623
      %v642 = vmul.f32 %v606, %v623
      %v643 = vmul.f32 %v607, %v623
      %v644 = vmul.f32 %v608, %v623
      %v645 = vmul.f32 %v609, %v623
      %v646 = vmul.f32 %v610, %v623
      %v647 = vmul.f32 %v611, %v623
      %v648 = vmul.f32 %v612, %v623
      %v649 = vmul.f32 %v613, %v623
      %v650 = vmul.f32 %v614, %v623
      %v651 = vmul.f32 %v615, %v623
      %v652 = vmul.f32 %v616, %v623
      %v653 = vmul.f32 %v617, %v623
      %v654 = vmul.f32 %v618, %v623
      %v655 = vmul.f32 %v619, %v623
      %v656 = vadd.f32 %v555, %v624
      %v657 = vadd.f32 %v556, %v625
      %v658 = vadd.f32 %v557, %v626
      %v659 = vadd.f32 %v558, %v627
      %v660 = vadd.f32 %v559, %v628
      %v661 = vadd.f32 %v560, %v629
      %v662 = vadd.f32 %v561, %v630
      %v663 = vadd.f32 %v562, %v631
      %v664 = vadd.f32 %v563, %v632
      %v665 = vadd.f32 %v564, %v633
      %v666 = vadd.f32 %v565, %v634
      %v667 = vadd.f32 %v566, %v635
      %v668 = vadd.f32 %v567, %v636
      %v669 = vadd.f32 %v568, %v637
      %v670 = vadd.f32 %v569, %v638
      %v671 = vadd.f32 %v570, %v639
      %v672 = vadd.f32 %v571, %v640
      %v673 = vadd.f32 %v572, %v641
      %v674 = vadd.f32 %v573, %v642
      %v675 = vadd.f32 %v574, %v643
      %v676 = vadd.f32 %v575, %v644
      %v677 = vadd.f32 %v576, %v645
      %v678 = vadd.f32 %v577, %v646
      %v679 = vadd.f32 %v578, %v647
      %v680 = vadd.f32 %v579, %v648
      %v681 = vadd.f32 %v580, %v649
      %v682 = vadd.f32 %v581, %v650
      %v683 = vadd.f32 %v582, %v651
      %v684 = vadd.f32 %v583, %v652
      %v685 = vadd.f32 %v584, %v653
      %v686 = vadd.f32 %v585, %v654
      %v687 = vadd.f32 %v586, %v655
      %v688 = vld [vmem:[%s1 + $0x5] sm:$0x1]
      %v689 = vld [vmem:[%s486 + $0x2] sm:$0xff]
      %v690 = vld [vmem:[%s486 + $0xa] sm:$0xff]
      %v691 = vld [vmem:[%s486 + $0x1a] sm:$0xff]
      %v692 = vld [vmem:[%s486 + $0x22] sm:$0xff]
      %v693 = vld [vmem:[%s486 + $0x32] sm:$0xff]
      %v694 = vld [vmem:[%s486 + $0x3a] sm:$0xff]
      %v695 = vld [vmem:[%s486 + $0x4a] sm:$0xff]
      %v696 = vld [vmem:[%s486 + $0x52] sm:$0xff]
      %v697 = vld [vmem:[%s486 + $0x62] sm:$0xff]
      %v698 = vld [vmem:[%s486 + $0x6a] sm:$0xff]
      %v699 = vld [vmem:[%s486 + $0x7a] sm:$0xff]
      %v700 = vld [vmem:[%s486 + $0x82] sm:$0xff]
      %v701 = vld [vmem:[%s486 + $0x92] sm:$0xff]
      %v702 = vld [vmem:[%s486 + $0x9a] sm:$0xff]
      %v703 = vld [vmem:[%s486 + $0xaa] sm:$0xff]
      %v704 = vld [vmem:[%s486 + $0xb2] sm:$0xff]
      %v705 = vld [vmem:[%s486 + $0xc2] sm:$0xff]
      %v706 = vld [vmem:[%s486 + $0xca] sm:$0xff]
      %v707 = vld [vmem:[%s486 + $0xda] sm:$0xff]
      %v708 = vld [vmem:[%s486 + $0xe2] sm:$0xff]
      %v709 = vld [vmem:[%s486 + $0xf2] sm:$0xff]
      %v710 = vld [vmem:[%s486 + $0xfa] sm:$0xff]
      %v711 = vld [vmem:[%s486 + $0x10a] sm:$0xff]
      %v712 = vld [vmem:[%s486 + $0x112] sm:$0xff]
      %v713 = vld [vmem:[%s486 + $0x122] sm:$0xff]
      %v714 = vld [vmem:[%s486 + $0x12a] sm:$0xff]
      %v715 = vld [vmem:[%s486 + $0x13a] sm:$0xff]
      %v716 = vld [vmem:[%s486 + $0x142] sm:$0xff]
      %v717 = vld [vmem:[%s486 + $0x152] sm:$0xff]
      %v718 = vld [vmem:[%s486 + $0x15a] sm:$0xff]
      %v719 = vld [vmem:[%s486 + $0x16a] sm:$0xff]
      %v720 = vld [vmem:[%s486 + $0x172] sm:$0xff]
      %v721 = vlaneseq
      %v722 = vshrl.u32 %v721, 7
      %v723 = vsub.s32 0, %v722
      %v724 = vrot.slane %v688, %v723
      %v725 = vmul.f32 %v689, %v724
      %v726 = vmul.f32 %v690, %v724
      %v727 = vmul.f32 %v691, %v724
      %v728 = vmul.f32 %v692, %v724
      %v729 = vmul.f32 %v693, %v724
      %v730 = vmul.f32 %v694, %v724
      %v731 = vmul.f32 %v695, %v724
      %v732 = vmul.f32 %v696, %v724
      %v733 = vmul.f32 %v697, %v724
      %v734 = vmul.f32 %v698, %v724
      %v735 = vmul.f32 %v699, %v724
      %v736 = vmul.f32 %v700, %v724
      %v737 = vmul.f32 %v701, %v724
      %v738 = vmul.f32 %v702, %v724
      %v739 = vmul.f32 %v703, %v724
      %v740 = vmul.f32 %v704, %v724
      %v741 = vmul.f32 %v705, %v724
      %v742 = vmul.f32 %v706, %v724
      %v743 = vmul.f32 %v707, %v724
      %v744 = vmul.f32 %v708, %v724
      %v745 = vmul.f32 %v709, %v724
      %v746 = vmul.f32 %v710, %v724
      %v747 = vmul.f32 %v711, %v724
      %v748 = vmul.f32 %v712, %v724
      %v749 = vmul.f32 %v713, %v724
      %v750 = vmul.f32 %v714, %v724
      %v751 = vmul.f32 %v715, %v724
      %v752 = vmul.f32 %v716, %v724
      %v753 = vmul.f32 %v717, %v724
      %v754 = vmul.f32 %v718, %v724
      %v755 = vmul.f32 %v719, %v724
      %v756 = vmul.f32 %v720, %v724
      %v757 = vadd.f32 %v656, %v725
      %v758 = vadd.f32 %v657, %v726
      %v759 = vadd.f32 %v658, %v727
      %v760 = vadd.f32 %v659, %v728
      %v761 = vadd.f32 %v660, %v729
      %v762 = vadd.f32 %v661, %v730
      %v763 = vadd.f32 %v662, %v731
      %v764 = vadd.f32 %v663, %v732
      %v765 = vadd.f32 %v664, %v733
      %v766 = vadd.f32 %v665, %v734
      %v767 = vadd.f32 %v666, %v735
      %v768 = vadd.f32 %v667, %v736
      %v769 = vadd.f32 %v668, %v737
      %v770 = vadd.f32 %v669, %v738
      %v771 = vadd.f32 %v670, %v739
      %v772 = vadd.f32 %v671, %v740
      %v773 = vadd.f32 %v672, %v741
      %v774 = vadd.f32 %v673, %v742
      %v775 = vadd.f32 %v674, %v743
      %v776 = vadd.f32 %v675, %v744
      %v777 = vadd.f32 %v676, %v745
      %v778 = vadd.f32 %v677, %v746
      %v779 = vadd.f32 %v678, %v747
      %v780 = vadd.f32 %v679, %v748
      %v781 = vadd.f32 %v680, %v749
      %v782 = vadd.f32 %v681, %v750
      %v783 = vadd.f32 %v682, %v751
      %v784 = vadd.f32 %v683, %v752
      %v785 = vadd.f32 %v684, %v753
      %v786 = vadd.f32 %v685, %v754
      %v787 = vadd.f32 %v686, %v755
      %v788 = vadd.f32 %v687, %v756
      %v789 = vld [vmem:[%s1 + $0x6] sm:$0x1]
      %s790 = scalar_lea.vmem %s172, 48
      %v791 = vld [vmem:[%s790] sm:$0xff]
      %v792 = vld [vmem:[%s790 + $0x8] sm:$0xff]
      %v793 = vld [vmem:[%s790 + $0x18] sm:$0xff]
      %v794 = vld [vmem:[%s790 + $0x20] sm:$0xff]
      %v795 = vld [vmem:[%s790 + $0x30] sm:$0xff]
      %v796 = vld [vmem:[%s790 + $0x38] sm:$0xff]
      %v797 = vld [vmem:[%s790 + $0x48] sm:$0xff]
      %v798 = vld [vmem:[%s790 + $0x50] sm:$0xff]
      %v799 = vld [vmem:[%s790 + $0x60] sm:$0xff]
      %v800 = vld [vmem:[%s790 + $0x68] sm:$0xff]
      %v801 = vld [vmem:[%s790 + $0x78] sm:$0xff]
      %v802 = vld [vmem:[%s790 + $0x80] sm:$0xff]
      %v803 = vld [vmem:[%s790 + $0x90] sm:$0xff]
      %v804 = vld [vmem:[%s790 + $0x98] sm:$0xff]
      %v805 = vld [vmem:[%s790 + $0xa8] sm:$0xff]
      %v806 = vld [vmem:[%s790 + $0xb0] sm:$0xff]
      %v807 = vld [vmem:[%s790 + $0xc0] sm:$0xff]
      %v808 = vld [vmem:[%s790 + $0xc8] sm:$0xff]
      %v809 = vld [vmem:[%s790 + $0xd8] sm:$0xff]
      %v810 = vld [vmem:[%s790 + $0xe0] sm:$0xff]
      %v811 = vld [vmem:[%s790 + $0xf0] sm:$0xff]
      %v812 = vld [vmem:[%s790 + $0xf8] sm:$0xff]
      %v813 = vld [vmem:[%s790 + $0x108] sm:$0xff]
      %v814 = vld [vmem:[%s790 + $0x110] sm:$0xff]
      %v815 = vld [vmem:[%s790 + $0x120] sm:$0xff]
      %v816 = vld [vmem:[%s790 + $0x128] sm:$0xff]
      %v817 = vld [vmem:[%s790 + $0x138] sm:$0xff]
      %v818 = vld [vmem:[%s790 + $0x140] sm:$0xff]
      %v819 = vld [vmem:[%s790 + $0x150] sm:$0xff]
      %v820 = vld [vmem:[%s790 + $0x158] sm:$0xff]
      %v821 = vld [vmem:[%s790 + $0x168] sm:$0xff]
      %v822 = vld [vmem:[%s790 + $0x170] sm:$0xff]
      %v823 = vlaneseq
      %v824 = vshrl.u32 %v823, 7
      %v825 = vsub.s32 0, %v824
      %v826 = vrot.slane %v789, %v825
      %v827 = vmul.f32 %v791, %v826
      %v828 = vmul.f32 %v792, %v826
      %v829 = vmul.f32 %v793, %v826
      %v830 = vmul.f32 %v794, %v826
      %v831 = vmul.f32 %v795, %v826
      %v832 = vmul.f32 %v796, %v826
      %v833 = vmul.f32 %v797, %v826
      %v834 = vmul.f32 %v798, %v826
      %v835 = vmul.f32 %v799, %v826
      %v836 = vmul.f32 %v800, %v826
      %v837 = vmul.f32 %v801, %v826
      %v838 = vmul.f32 %v802, %v826
      %v839 = vmul.f32 %v803, %v826
      %v840 = vmul.f32 %v804, %v826
      %v841 = vmul.f32 %v805, %v826
      %v842 = vmul.f32 %v806, %v826
      %v843 = vmul.f32 %v807, %v826
      %v844 = vmul.f32 %v808, %v826
      %v845 = vmul.f32 %v809, %v826
      %v846 = vmul.f32 %v810, %v826
      %v847 = vmul.f32 %v811, %v826
      %v848 = vmul.f32 %v812, %v826
      %v849 = vmul.f32 %v813, %v826
      %v850 = vmul.f32 %v814, %v826
      %v851 = vmul.f32 %v815, %v826
      %v852 = vmul.f32 %v816, %v826
      %v853 = vmul.f32 %v817, %v826
      %v854 = vmul.f32 %v818, %v826
      %v855 = vmul.f32 %v819, %v826
      %v856 = vmul.f32 %v820, %v826
      %v857 = vmul.f32 %v821, %v826
      %v858 = vmul.f32 %v822, %v826
      %v859 = vadd.f32 %v757, %v827
      %v860 = vadd.f32 %v758, %v828
      %v861 = vadd.f32 %v759, %v829
      %v862 = vadd.f32 %v760, %v830
      %v863 = vadd.f32 %v761, %v831
      %v864 = vadd.f32 %v762, %v832
      %v865 = vadd.f32 %v763, %v833
      %v866 = vadd.f32 %v764, %v834
      %v867 = vadd.f32 %v765, %v835
      %v868 = vadd.f32 %v766, %v836
      %v869 = vadd.f32 %v767, %v837
      %v870 = vadd.f32 %v768, %v838
      %v871 = vadd.f32 %v769, %v839
      %v872 = vadd.f32 %v770, %v840
      %v873 = vadd.f32 %v771, %v841
      %v874 = vadd.f32 %v772, %v842
      %v875 = vadd.f32 %v773, %v843
      %v876 = vadd.f32 %v774, %v844
      %v877 = vadd.f32 %v775, %v845
      %v878 = vadd.f32 %v776, %v846
      %v879 = vadd.f32 %v777, %v847
      %v880 = vadd.f32 %v778, %v848
      %v881 = vadd.f32 %v779, %v849
      %v882 = vadd.f32 %v780, %v850
      %v883 = vadd.f32 %v781, %v851
      %v884 = vadd.f32 %v782, %v852
      %v885 = vadd.f32 %v783, %v853
      %v886 = vadd.f32 %v784, %v854
      %v887 = vadd.f32 %v785, %v855
      %v888 = vadd.f32 %v786, %v856
      %v889 = vadd.f32 %v787, %v857
      %v890 = vadd.f32 %v788, %v858
      %v891 = vld [vmem:[%s1 + $0x7] sm:$0x1]
      %v892 = vld [vmem:[%s790 + $0x1] sm:$0xff]
      %v893 = vld [vmem:[%s790 + $0x9] sm:$0xff]
      %v894 = vld [vmem:[%s790 + $0x19] sm:$0xff]
      %v895 = vld [vmem:[%s790 + $0x21] sm:$0xff]
      %v896 = vld [vmem:[%s790 + $0x31] sm:$0xff]
      %v897 = vld [vmem:[%s790 + $0x39] sm:$0xff]
      %v898 = vld [vmem:[%s790 + $0x49] sm:$0xff]
      %v899 = vld [vmem:[%s790 + $0x51] sm:$0xff]
      %v900 = vld [vmem:[%s790 + $0x61] sm:$0xff]
      %v901 = vld [vmem:[%s790 + $0x69] sm:$0xff]
      %v902 = vld [vmem:[%s790 + $0x79] sm:$0xff]
      %v903 = vld [vmem:[%s790 + $0x81] sm:$0xff]
      %v904 = vld [vmem:[%s790 + $0x91] sm:$0xff]
      %v905 = vld [vmem:[%s790 + $0x99] sm:$0xff]
      %v906 = vld [vmem:[%s790 + $0xa9] sm:$0xff]
      %v907 = vld [vmem:[%s790 + $0xb1] sm:$0xff]
      %v908 = vld [vmem:[%s790 + $0xc1] sm:$0xff]
      %v909 = vld [vmem:[%s790 + $0xc9] sm:$0xff]
      %v910 = vld [vmem:[%s790 + $0xd9] sm:$0xff]
      %v911 = vld [vmem:[%s790 + $0xe1] sm:$0xff]
      %v912 = vld [vmem:[%s790 + $0xf1] sm:$0xff]
      %v913 = vld [vmem:[%s790 + $0xf9] sm:$0xff]
      %v914 = vld [vmem:[%s790 + $0x109] sm:$0xff]
      %v915 = vld [vmem:[%s790 + $0x111] sm:$0xff]
      %v916 = vld [vmem:[%s790 + $0x121] sm:$0xff]
      %v917 = vld [vmem:[%s790 + $0x129] sm:$0xff]
      %v918 = vld [vmem:[%s790 + $0x139] sm:$0xff]
      %v919 = vld [vmem:[%s790 + $0x141] sm:$0xff]
      %v920 = vld [vmem:[%s790 + $0x151] sm:$0xff]
      %v921 = vld [vmem:[%s790 + $0x159] sm:$0xff]
      %v922 = vld [vmem:[%s790 + $0x169] sm:$0xff]
      %v923 = vld [vmem:[%s790 + $0x171] sm:$0xff]
      %v924 = vlaneseq
      %v925 = vshrl.u32 %v924, 7
      %v926 = vsub.s32 0, %v925
      %v927 = vrot.slane %v891, %v926
      %v928 = vmul.f32 %v892, %v927
      %v929 = vmul.f32 %v893, %v927
      %v930 = vmul.f32 %v894, %v927
      %v931 = vmul.f32 %v895, %v927
      %v932 = vmul.f32 %v896, %v927
      %v933 = vmul.f32 %v897, %v927
      %v934 = vmul.f32 %v898, %v927
      %v935 = vmul.f32 %v899, %v927
      %v936 = vmul.f32 %v900, %v927
      %v937 = vmul.f32 %v901, %v927
      %v938 = vmul.f32 %v902, %v927
      %v939 = vmul.f32 %v903, %v927
      %v940 = vmul.f32 %v904, %v927
      %v941 = vmul.f32 %v905, %v927
      %v942 = vmul.f32 %v906, %v927
      %v943 = vmul.f32 %v907, %v927
      %v944 = vmul.f32 %v908, %v927
      %v945 = vmul.f32 %v909, %v927
      %v946 = vmul.f32 %v910, %v927
      %v947 = vmul.f32 %v911, %v927
      %v948 = vmul.f32 %v912, %v927
      %v949 = vmul.f32 %v913, %v927
      %v950 = vmul.f32 %v914, %v927
      %v951 = vmul.f32 %v915, %v927
      %v952 = vmul.f32 %v916, %v927
      %v953 = vmul.f32 %v917, %v927
      %v954 = vmul.f32 %v918, %v927
      %v955 = vmul.f32 %v919, %v927
      %v956 = vmul.f32 %v920, %v927
      %v957 = vmul.f32 %v921, %v927
      %v958 = vmul.f32 %v922, %v927
      %v959 = vmul.f32 %v923, %v927
      %v960 = vadd.f32 %v859, %v928
      %v961 = vadd.f32 %v860, %v929
      %v962 = vadd.f32 %v861, %v930
      %v963 = vadd.f32 %v862, %v931
      %v964 = vadd.f32 %v863, %v932
      %v965 = vadd.f32 %v864, %v933
      %v966 = vadd.f32 %v865, %v934
      %v967 = vadd.f32 %v866, %v935
      %v968 = vadd.f32 %v867, %v936
      %v969 = vadd.f32 %v868, %v937
      %v970 = vadd.f32 %v869, %v938
      %v971 = vadd.f32 %v870, %v939
      %v972 = vadd.f32 %v871, %v940
      %v973 = vadd.f32 %v872, %v941
      %v974 = vadd.f32 %v873, %v942
      %v975 = vadd.f32 %v874, %v943
      %v976 = vadd.f32 %v875, %v944
      %v977 = vadd.f32 %v876, %v945
      %v978 = vadd.f32 %v877, %v946
      %v979 = vadd.f32 %v878, %v947
      %v980 = vadd.f32 %v879, %v948
      %v981 = vadd.f32 %v880, %v949
      %v982 = vadd.f32 %v881, %v950
      %v983 = vadd.f32 %v882, %v951
      %v984 = vadd.f32 %v883, %v952
      %v985 = vadd.f32 %v884, %v953
      %v986 = vadd.f32 %v885, %v954
      %v987 = vadd.f32 %v886, %v955
      %v988 = vadd.f32 %v887, %v956
      %v989 = vadd.f32 %v888, %v957
      %v990 = vadd.f32 %v889, %v958
      %v991 = vadd.f32 %v890, %v959
      %v992 = vld [vmem:[%s1 + $0x8] sm:$0x1]
      %v993 = vld [vmem:[%s790 + $0x2] sm:$0xff]
      %v994 = vld [vmem:[%s790 + $0xa] sm:$0xff]
      %v995 = vld [vmem:[%s790 + $0x1a] sm:$0xff]
      %v996 = vld [vmem:[%s790 + $0x22] sm:$0xff]
      %v997 = vld [vmem:[%s790 + $0x32] sm:$0xff]
      %v998 = vld [vmem:[%s790 + $0x3a] sm:$0xff]
      %v999 = vld [vmem:[%s790 + $0x4a] sm:$0xff]
      %v1000 = vld [vmem:[%s790 + $0x52] sm:$0xff]
      %v1001 = vld [vmem:[%s790 + $0x62] sm:$0xff]
      %v1002 = vld [vmem:[%s790 + $0x6a] sm:$0xff]
      %v1003 = vld [vmem:[%s790 + $0x7a] sm:$0xff]
      %v1004 = vld [vmem:[%s790 + $0x82] sm:$0xff]
      %v1005 = vld [vmem:[%s790 + $0x92] sm:$0xff]
      %v1006 = vld [vmem:[%s790 + $0x9a] sm:$0xff]
      %v1007 = vld [vmem:[%s790 + $0xaa] sm:$0xff]
      %v1008 = vld [vmem:[%s790 + $0xb2] sm:$0xff]
      %v1009 = vld [vmem:[%s790 + $0xc2] sm:$0xff]
      %v1010 = vld [vmem:[%s790 + $0xca] sm:$0xff]
      %v1011 = vld [vmem:[%s790 + $0xda] sm:$0xff]
      %v1012 = vld [vmem:[%s790 + $0xe2] sm:$0xff]
      %v1013 = vld [vmem:[%s790 + $0xf2] sm:$0xff]
      %v1014 = vld [vmem:[%s790 + $0xfa] sm:$0xff]
      %v1015 = vld [vmem:[%s790 + $0x10a] sm:$0xff]
      %v1016 = vld [vmem:[%s790 + $0x112] sm:$0xff]
      %v1017 = vld [vmem:[%s790 + $0x122] sm:$0xff]
      %v1018 = vld [vmem:[%s790 + $0x12a] sm:$0xff]
      %v1019 = vld [vmem:[%s790 + $0x13a] sm:$0xff]
      %v1020 = vld [vmem:[%s790 + $0x142] sm:$0xff]
      %v1021 = vld [vmem:[%s790 + $0x152] sm:$0xff]
      %v1022 = vld [vmem:[%s790 + $0x15a] sm:$0xff]
      %v1023 = vld [vmem:[%s790 + $0x16a] sm:$0xff]
      %v1024 = vld [vmem:[%s790 + $0x172] sm:$0xff]
      %v1025 = vlaneseq
      %v1026 = vshrl.u32 %v1025, 7
      %v1027 = vsub.s32 0, %v1026
      %v1028 = vrot.slane %v992, %v1027
      %v1029 = vmul.f32 %v993, %v1028
      %v1030 = vmul.f32 %v994, %v1028
      %v1031 = vmul.f32 %v995, %v1028
      %v1032 = vmul.f32 %v996, %v1028
      %v1033 = vmul.f32 %v997, %v1028
      %v1034 = vmul.f32 %v998, %v1028
      %v1035 = vmul.f32 %v999, %v1028
      %v1036 = vmul.f32 %v1000, %v1028
      %v1037 = vmul.f32 %v1001, %v1028
      %v1038 = vmul.f32 %v1002, %v1028
      %v1039 = vmul.f32 %v1003, %v1028
      %v1040 = vmul.f32 %v1004, %v1028
      %v1041 = vmul.f32 %v1005, %v1028
      %v1042 = vmul.f32 %v1006, %v1028
      %v1043 = vmul.f32 %v1007, %v1028
      %v1044 = vmul.f32 %v1008, %v1028
      %v1045 = vmul.f32 %v1009, %v1028
      %v1046 = vmul.f32 %v1010, %v1028
      %v1047 = vmul.f32 %v1011, %v1028
      %v1048 = vmul.f32 %v1012, %v1028
      %v1049 = vmul.f32 %v1013, %v1028
      %v1050 = vmul.f32 %v1014, %v1028
      %v1051 = vmul.f32 %v1015, %v1028
      %v1052 = vmul.f32 %v1016, %v1028
      %v1053 = vmul.f32 %v1017, %v1028
      %v1054 = vmul.f32 %v1018, %v1028
      %v1055 = vmul.f32 %v1019, %v1028
      %v1056 = vmul.f32 %v1020, %v1028
      %v1057 = vmul.f32 %v1021, %v1028
      %v1058 = vmul.f32 %v1022, %v1028
      %v1059 = vmul.f32 %v1023, %v1028
      %v1060 = vmul.f32 %v1024, %v1028
      %v1061 = vadd.f32 %v960, %v1029
      %v1062 = vadd.f32 %v961, %v1030
      %v1063 = vadd.f32 %v962, %v1031
      %v1064 = vadd.f32 %v963, %v1032
      %v1065 = vadd.f32 %v964, %v1033
      %v1066 = vadd.f32 %v965, %v1034
      %v1067 = vadd.f32 %v966, %v1035
      %v1068 = vadd.f32 %v967, %v1036
      %v1069 = vadd.f32 %v968, %v1037
      %v1070 = vadd.f32 %v969, %v1038
      %v1071 = vadd.f32 %v970, %v1039
      %v1072 = vadd.f32 %v971, %v1040
      %v1073 = vadd.f32 %v972, %v1041
      %v1074 = vadd.f32 %v973, %v1042
      %v1075 = vadd.f32 %v974, %v1043
      %v1076 = vadd.f32 %v975, %v1044
      %v1077 = vadd.f32 %v976, %v1045
      %v1078 = vadd.f32 %v977, %v1046
      %v1079 = vadd.f32 %v978, %v1047
      %v1080 = vadd.f32 %v979, %v1048
      %v1081 = vadd.f32 %v980, %v1049
      %v1082 = vadd.f32 %v981, %v1050
      %v1083 = vadd.f32 %v982, %v1051
      %v1084 = vadd.f32 %v983, %v1052
      %v1085 = vadd.f32 %v984, %v1053
      %v1086 = vadd.f32 %v985, %v1054
      %v1087 = vadd.f32 %v986, %v1055
      %v1088 = vadd.f32 %v987, %v1056
      %v1089 = vadd.f32 %v988, %v1057
      %v1090 = vadd.f32 %v989, %v1058
      %v1091 = vadd.f32 %v990, %v1059
      %v1092 = vadd.f32 %v991, %v1060
      %vm1093 = vcmask 31744
      %1094 = vst.msk [vmem:[%s177] sm:$0xff] %vm1093, %v1061
      %1095 = vst.msk [vmem:[%s177 + $0x8] sm:$0xff] %vm1093, %v1062
      %1096 = vst.msk [vmem:[%s177 + $0x10] sm:$0xff] %vm1093, %v1063
      %1097 = vst.msk [vmem:[%s177 + $0x18] sm:$0xff] %vm1093, %v1064
      %1098 = vst.msk [vmem:[%s177 + $0x20] sm:$0xff] %vm1093, %v1065
      %1099 = vst.msk [vmem:[%s177 + $0x28] sm:$0xff] %vm1093, %v1066
      %1100 = vst.msk [vmem:[%s177 + $0x30] sm:$0xff] %vm1093, %v1067
      %1101 = vst.msk [vmem:[%s177 + $0x38] sm:$0xff] %vm1093, %v1068
      %1102 = vst.msk [vmem:[%s177 + $0x40] sm:$0xff] %vm1093, %v1069
      %1103 = vst.msk [vmem:[%s177 + $0x48] sm:$0xff] %vm1093, %v1070
      %1104 = vst.msk [vmem:[%s177 + $0x50] sm:$0xff] %vm1093, %v1071
      %1105 = vst.msk [vmem:[%s177 + $0x58] sm:$0xff] %vm1093, %v1072
      %1106 = vst.msk [vmem:[%s177 + $0x60] sm:$0xff] %vm1093, %v1073
      %1107 = vst.msk [vmem:[%s177 + $0x68] sm:$0xff] %vm1093, %v1074
      %1108 = vst.msk [vmem:[%s177 + $0x70] sm:$0xff] %vm1093, %v1075
      %1109 = vst.msk [vmem:[%s177 + $0x78] sm:$0xff] %vm1093, %v1076
      %1110 = vst.msk [vmem:[%s177 + $0x80] sm:$0xff] %vm1093, %v1077
      %1111 = vst.msk [vmem:[%s177 + $0x88] sm:$0xff] %vm1093, %v1078
      %1112 = vst.msk [vmem:[%s177 + $0x90] sm:$0xff] %vm1093, %v1079
      %1113 = vst.msk [vmem:[%s177 + $0x98] sm:$0xff] %vm1093, %v1080
      %1114 = vst.msk [vmem:[%s177 + $0xa0] sm:$0xff] %vm1093, %v1081
      %1115 = vst.msk [vmem:[%s177 + $0xa8] sm:$0xff] %vm1093, %v1082
      %1116 = vst.msk [vmem:[%s177 + $0xb0] sm:$0xff] %vm1093, %v1083
      %1117 = vst.msk [vmem:[%s177 + $0xb8] sm:$0xff] %vm1093, %v1084
      %1118 = vst.msk [vmem:[%s177 + $0xc0] sm:$0xff] %vm1093, %v1085
      %1119 = vst.msk [vmem:[%s177 + $0xc8] sm:$0xff] %vm1093, %v1086
      %1120 = vst.msk [vmem:[%s177 + $0xd0] sm:$0xff] %vm1093, %v1087
      %1121 = vst.msk [vmem:[%s177 + $0xd8] sm:$0xff] %vm1093, %v1088
      %1122 = vst.msk [vmem:[%s177 + $0xe0] sm:$0xff] %vm1093, %v1089
      %1123 = vst.msk [vmem:[%s177 + $0xe8] sm:$0xff] %vm1093, %v1090
      %1124 = vst.msk [vmem:[%s177 + $0xf0] sm:$0xff] %vm1093, %v1091
      %1125 = vst.msk [vmem:[%s177 + $0xf8] sm:$0xff] %vm1093, %v1092
      %v1126 = vsel %vm1093, %v1061, 0.0
      %v1127 = vsel %vm1093, %v1062, 0.0
      %v1128 = vadd.f32 %v1126, %v1127
      %v1129 = vsel %vm1093, %v1063, 0.0
      %v1130 = vadd.f32 %v1128, %v1129
      %v1131 = vsel %vm1093, %v1064, 0.0
      %v1132 = vadd.f32 %v1130, %v1131
      %v1133 = vsel %vm1093, %v1065, 0.0
      %v1134 = vadd.f32 %v1132, %v1133
      %v1135 = vsel %vm1093, %v1066, 0.0
      %v1136 = vadd.f32 %v1134, %v1135
      %v1137 = vsel %vm1093, %v1067, 0.0
      %v1138 = vadd.f32 %v1136, %v1137
      %v1139 = vsel %vm1093, %v1068, 0.0
      %v1140 = vadd.f32 %v1138, %v1139
      %v1141 = vsel %vm1093, %v1069, 0.0
      %v1142 = vadd.f32 %v1140, %v1141
      %v1143 = vsel %vm1093, %v1070, 0.0
      %v1144 = vadd.f32 %v1142, %v1143
      %v1145 = vsel %vm1093, %v1071, 0.0
      %v1146 = vadd.f32 %v1144, %v1145
      %v1147 = vsel %vm1093, %v1072, 0.0
      %v1148 = vadd.f32 %v1146, %v1147
      %v1149 = vsel %vm1093, %v1073, 0.0
      %v1150 = vadd.f32 %v1148, %v1149
      %v1151 = vsel %vm1093, %v1074, 0.0
      %v1152 = vadd.f32 %v1150, %v1151
      %v1153 = vsel %vm1093, %v1075, 0.0
      %v1154 = vadd.f32 %v1152, %v1153
      %v1155 = vsel %vm1093, %v1076, 0.0
      %v1156 = vadd.f32 %v1154, %v1155
      %v1157 = vsel %vm1093, %v1077, 0.0
      %v1158 = vadd.f32 %v1156, %v1157
      %v1159 = vsel %vm1093, %v1078, 0.0
      %v1160 = vadd.f32 %v1158, %v1159
      %v1161 = vsel %vm1093, %v1079, 0.0
      %v1162 = vadd.f32 %v1160, %v1161
      %v1163 = vsel %vm1093, %v1080, 0.0
      %v1164 = vadd.f32 %v1162, %v1163
      %v1165 = vsel %vm1093, %v1081, 0.0
      %v1166 = vadd.f32 %v1164, %v1165
      %v1167 = vsel %vm1093, %v1082, 0.0
      %v1168 = vadd.f32 %v1166, %v1167
      %v1169 = vsel %vm1093, %v1083, 0.0
      %v1170 = vadd.f32 %v1168, %v1169
      %v1171 = vsel %vm1093, %v1084, 0.0
      %v1172 = vadd.f32 %v1170, %v1171
      %v1173 = vsel %vm1093, %v1085, 0.0
      %v1174 = vadd.f32 %v1172, %v1173
      %v1175 = vsel %vm1093, %v1086, 0.0
      %v1176 = vadd.f32 %v1174, %v1175
      %v1177 = vsel %vm1093, %v1087, 0.0
      %v1178 = vadd.f32 %v1176, %v1177
      %v1179 = vsel %vm1093, %v1088, 0.0
      %v1180 = vadd.f32 %v1178, %v1179
      %v1181 = vsel %vm1093, %v1089, 0.0
      %v1182 = vadd.f32 %v1180, %v1181
      %v1183 = vsel %vm1093, %v1090, 0.0
      %v1184 = vadd.f32 %v1182, %v1183
      %v1185 = vsel %vm1093, %v1091, 0.0
      %v1186 = vadd.f32 %v1184, %v1185
      %v1187 = vsel %vm1093, %v1092, 0.0
      %v1188 = vadd.f32 %v1186, %v1187
      %v1189 = vrot.slane %v1188, 4
      %v1190 = vadd.f32 %v1188, %v1189
      %v1191 = vrot.slane %v1190, 2
      %v1192 = vadd.f32 %v1190, %v1191
      %v1193 = vrot.slane %v1192, 1
      %v1194 = vadd.f32 %v1192, %v1193
      %vm1195 = vcmask 24576
      %1196 = vst.msk [vmem:[%s181] sm:$0x1] %vm1195, %v1194
      %v1197 = vmul.f32 %v1061, %v1061
      %v1198 = vmul.f32 %v1062, %v1062
      %v1199 = vmul.f32 %v1063, %v1063
      %v1200 = vmul.f32 %v1064, %v1064
      %v1201 = vmul.f32 %v1065, %v1065
      %v1202 = vmul.f32 %v1066, %v1066
      %v1203 = vmul.f32 %v1067, %v1067
      %v1204 = vmul.f32 %v1068, %v1068
      %v1205 = vmul.f32 %v1069, %v1069
      %v1206 = vmul.f32 %v1070, %v1070
      %v1207 = vmul.f32 %v1071, %v1071
      %v1208 = vmul.f32 %v1072, %v1072
      %v1209 = vmul.f32 %v1073, %v1073
      %v1210 = vmul.f32 %v1074, %v1074
      %v1211 = vmul.f32 %v1075, %v1075
      %v1212 = vmul.f32 %v1076, %v1076
      %v1213 = vmul.f32 %v1077, %v1077
      %v1214 = vmul.f32 %v1078, %v1078
      %v1215 = vmul.f32 %v1079, %v1079
      %v1216 = vmul.f32 %v1080, %v1080
      %v1217 = vmul.f32 %v1081, %v1081
      %v1218 = vmul.f32 %v1082, %v1082
      %v1219 = vmul.f32 %v1083, %v1083
      %v1220 = vmul.f32 %v1084, %v1084
      %v1221 = vmul.f32 %v1085, %v1085
      %v1222 = vmul.f32 %v1086, %v1086
      %v1223 = vmul.f32 %v1087, %v1087
      %v1224 = vmul.f32 %v1088, %v1088
      %v1225 = vmul.f32 %v1089, %v1089
      %v1226 = vmul.f32 %v1090, %v1090
      %v1227 = vmul.f32 %v1091, %v1091
      %v1228 = vmul.f32 %v1092, %v1092
      %v1229 = vsel %vm1093, %v1197, 0.0
      %v1230 = vsel %vm1093, %v1198, 0.0
      %v1231 = vadd.f32 %v1229, %v1230
      %v1232 = vsel %vm1093, %v1199, 0.0
      %v1233 = vadd.f32 %v1231, %v1232
      %v1234 = vsel %vm1093, %v1200, 0.0
      %v1235 = vadd.f32 %v1233, %v1234
      %v1236 = vsel %vm1093, %v1201, 0.0
      %v1237 = vadd.f32 %v1235, %v1236
      %v1238 = vsel %vm1093, %v1202, 0.0
      %v1239 = vadd.f32 %v1237, %v1238
      %v1240 = vsel %vm1093, %v1203, 0.0
      %v1241 = vadd.f32 %v1239, %v1240
      %v1242 = vsel %vm1093, %v1204, 0.0
      %v1243 = vadd.f32 %v1241, %v1242
      %v1244 = vsel %vm1093, %v1205, 0.0
      %v1245 = vadd.f32 %v1243, %v1244
      %v1246 = vsel %vm1093, %v1206, 0.0
      %v1247 = vadd.f32 %v1245, %v1246
      %v1248 = vsel %vm1093, %v1207, 0.0
      %v1249 = vadd.f32 %v1247, %v1248
      %v1250 = vsel %vm1093, %v1208, 0.0
      %v1251 = vadd.f32 %v1249, %v1250
      %v1252 = vsel %vm1093, %v1209, 0.0
      %v1253 = vadd.f32 %v1251, %v1252
      %v1254 = vsel %vm1093, %v1210, 0.0
      %v1255 = vadd.f32 %v1253, %v1254
      %v1256 = vsel %vm1093, %v1211, 0.0
      %v1257 = vadd.f32 %v1255, %v1256
      %v1258 = vsel %vm1093, %v1212, 0.0
      %v1259 = vadd.f32 %v1257, %v1258
      %v1260 = vsel %vm1093, %v1213, 0.0
      %v1261 = vadd.f32 %v1259, %v1260
      %v1262 = vsel %vm1093, %v1214, 0.0
      %v1263 = vadd.f32 %v1261, %v1262
      %v1264 = vsel %vm1093, %v1215, 0.0
      %v1265 = vadd.f32 %v1263, %v1264
      %v1266 = vsel %vm1093, %v1216, 0.0
      %v1267 = vadd.f32 %v1265, %v1266
      %v1268 = vsel %vm1093, %v1217, 0.0
      %v1269 = vadd.f32 %v1267, %v1268
      %v1270 = vsel %vm1093, %v1218, 0.0
      %v1271 = vadd.f32 %v1269, %v1270
      %v1272 = vsel %vm1093, %v1219, 0.0
      %v1273 = vadd.f32 %v1271, %v1272
      %v1274 = vsel %vm1093, %v1220, 0.0
      %v1275 = vadd.f32 %v1273, %v1274
      %v1276 = vsel %vm1093, %v1221, 0.0
      %v1277 = vadd.f32 %v1275, %v1276
      %v1278 = vsel %vm1093, %v1222, 0.0
      %v1279 = vadd.f32 %v1277, %v1278
      %v1280 = vsel %vm1093, %v1223, 0.0
      %v1281 = vadd.f32 %v1279, %v1280
      %v1282 = vsel %vm1093, %v1224, 0.0
      %v1283 = vadd.f32 %v1281, %v1282
      %v1284 = vsel %vm1093, %v1225, 0.0
      %v1285 = vadd.f32 %v1283, %v1284
      %v1286 = vsel %vm1093, %v1226, 0.0
      %v1287 = vadd.f32 %v1285, %v1286
      %v1288 = vsel %vm1093, %v1227, 0.0
      %v1289 = vadd.f32 %v1287, %v1288
      %v1290 = vsel %vm1093, %v1228, 0.0
      %v1291 = vadd.f32 %v1289, %v1290
      %v1292 = vrot.slane %v1291, 4
      %v1293 = vadd.f32 %v1291, %v1292
      %v1294 = vrot.slane %v1293, 2
      %v1295 = vadd.f32 %v1293, %v1294
      %v1296 = vrot.slane %v1295, 1
      %v1297 = vadd.f32 %v1295, %v1296
      %1298 = vst.msk [vmem:[%s181 + $0x1] sm:$0x1] %vm1195, %v1297
      %p1299 = scmp.lt.s32.totalorder %s15, 1
      %s1300 = scalar_select %p1299, %s15, 1
      %s1301 = smul.addr %s1300, 32
      %s1302 = smul.addr %s1301, 8
      %s1303 = scalar_lea.vmem %s2, %s1302
      %p1304 = scmp.lt.s32.totalorder %s15, 1
      %s1305 = scalar_select %p1304, %s15, 1
      %s1306 = smul.addr %s1305, 2
      %s1307 = scalar_lea.vmem %s3, %s1306
      // Predicated region
      $region29: #{mobilenet_block.3} parent=27 // pred_check
        %p1308 = pneg %p80
      $region30: #{mobilenet_block.3} parent=27 // pred_check_branch
        %1310 = sbr.rel (%p1308) target = $region32
      $region31: #{mobilenet_block.3} parent=27 // pred_region
        _
      $region32: #{mobilenet_block.3} parent=27 // pred_fallthru
        _
      // Predicated region
      $region33: #{mobilenet_block.3} parent=27 // pred_check
        %p1311 = pneg %p106
      $region34: #{mobilenet_block.3} parent=27 // pred_check_branch
        %1313 = sbr.rel (%p1311) target = $region36
      $region35: #{mobilenet_block.3} parent=27 // pred_region
        _
      $region36: #{mobilenet_block.3} parent=27 // pred_fallthru
        _
    $region28: #{mobilenet_block.3} parent=5 // pred_fallthru
      _
    %p1314 = scmp.le.s32.totalorder 2, %s10
    // Predicated region
    $region37: #{mobilenet_block.3} parent=5 // pred_check
      %p1315 = pneg %p1314
    $region38: #{mobilenet_block.3} parent=5 // pred_check_branch
      %1317 = sbr.rel (%p1315) target = $region40
    $region39: #{mobilenet_block.3} parent=5 // pred_region
      %s1318 = ssub.s32 %s10, 2
      // Predicated region
      $region41: #{mobilenet_block.3} parent=39 // pred_check
        %p1319 = pneg %p86
      $region42: #{mobilenet_block.3} parent=39 // pred_check_branch
        %1321 = sbr.rel (%p1319) target = $region44
      $region43: #{mobilenet_block.3} parent=39 // pred_region
        %p1322 = scmp.lt.s32.totalorder %s16, 1
        %s1323 = scalar_select %p1322, %s16, 1
        %s1324 = smul.addr %s1323, 32
        %s1325 = smul.addr %s1324, 8
        %s1326 = scalar_lea.vmem %s2, %s1325
      $region44: #{mobilenet_block.3} parent=39 // pred_fallthru
        _
      // Predicated region
      $region45: #{mobilenet_block.3} parent=39 // pred_check
        %p1327 = pneg %p112
      $region46: #{mobilenet_block.3} parent=39 // pred_check_branch
        %1329 = sbr.rel (%p1327) target = $region48
      $region47: #{mobilenet_block.3} parent=39 // pred_region
        %p1330 = scmp.lt.s32.totalorder %s16, 1
        %s1331 = scalar_select %p1330, %s16, 1
        %s1332 = smul.addr %s1331, 2
        %s1333 = scalar_lea.vmem %s3, %s1332
      $region48: #{mobilenet_block.3} parent=39 // pred_fallthru
        _
    $region40: #{mobilenet_block.3} parent=5 // pred_fallthru
      _
  $region6: #{mobilenet_block.3} parent=0 // loop_footer
    %s14 = sadd.s32 1, %s10
  $region7: #{mobilenet_block.3} parent=0 // loop_footer_branch
    %9 = sbr.rel target = $region3
  $region8: #{mobilenet_block.3} parent=0 // loop_exit
    _

</llo_original>
